<compile_context>
chip_gen: v7x
topology: tpu7x:2x2x1
jax: 0.10.0
libtpu: 0.0.40
codegen_flags: <defaults>
</compile_context>

<pallas_src>
import jax
import jax.numpy as jnp
from jax import lax
from jax.experimental import pallas as pl
from jax.experimental.pallas import tpu as pltpu


def _round_up(x: int, m: int) -> int:
    return (x + m - 1) // m * m


# --------------------------- recurrence kernel ------------------------------

def _make_gru_kernel(tt: int, hp: int, t_total: int, mask_tail: bool):
    """GRU recurrence over `tt` time steps per grid iteration.

    Kernel refs:
      gi_ref   : (tt, Bp, 3*hp) f32  precomputed input projection (time-major)
      w_hh_ref : (hp, 3*hp)          W_hh^T, resident in VMEM (constant index)
      b_n_ref  : (1, hp) f32         hidden bias of the n-gate (kept separate,
                                     it is multiplied by r inside the cell)
      h_ref    : (Bp, hp) f32        hidden state; resident output block that
                                     doubles as the recurrence carry
    """

    def kernel(gi_ref, w_hh_ref, b_n_ref, h_ref):
        blk = pl.program_id(0)

        @pl.when(blk == 0)
        def _():
            h_ref[...] = jnp.zeros_like(h_ref)

        w_hh = w_hh_ref[...]          # (hp, 3*hp), compute dtype (bf16 or f32)
        b_n = b_n_ref[...]            # (1, hp) f32

        def step(t, h):
            gi_t = gi_ref[t]          # (Bp, 3*hp) f32 — lane-aligned gate slices
            gh = jnp.dot(h.astype(w_hh.dtype), w_hh,
                         preferred_element_type=jnp.float32)
            r = jax.nn.sigmoid(gi_t[:, 0:hp] + gh[:, 0:hp])
            z = jax.nn.sigmoid(gi_t[:, hp:2 * hp] + gh[:, hp:2 * hp])
            n = jnp.tanh(gi_t[:, 2 * hp:3 * hp] + r * (gh[:, 2 * hp:3 * hp] + b_n))
            h_new = (1.0 - z) * n + z * h
            if mask_tail:  # only traced when T is not a multiple of tt
                h_new = jnp.where(blk * tt + t < t_total, h_new, h)
            return h_new

        h_ref[...] = lax.fori_loop(0, tt, step, h_ref[...], unroll=True)

    return kernel


# ------------------------------- forward ------------------------------------

def gru_forward(x_btd, w_ih, w_hh, b_ih, b_hh, w_fc, b_fc,
                *, time_block=32, use_bf16=True):
    """x_btd: (B, T, D) f32 (batch_first, like the PyTorch module).
    PyTorch param layouts: w_ih (3H, D), w_hh (3H, H), b_* (3H,),
    w_fc (O, H), b_fc (O,).  Returns (B, O) f32."""
    B, T, D = x_btd.shape
    H = w_hh.shape[1]

    Hp = _round_up(H, 128)          # lane-aligned gate width
    Bp = _round_up(B, 8)            # f32 sublane alignment
    TT = min(time_block, T)         # time steps per grid iteration
    Tp = _round_up(T, TT)
    mask_tail = Tp != T

    compute_dtype = jnp.bfloat16 if use_bf16 else jnp.float32

    # ---- per-gate zero padding of parameters to Hp ----
    w_ih_g = w_ih.reshape(3, H, D)
    w_hh_g = w_hh.reshape(3, H, H)
    b_ih_g = b_ih.reshape(3, H)
    b_hh_g = b_hh.reshape(3, H)

    w_ih_p = jnp.zeros((3, Hp, D), jnp.float32).at[:, :H, :].set(w_ih_g)
    w_hh_p = jnp.zeros((3, Hp, Hp), jnp.float32).at[:, :H, :H].set(w_hh_g)

    # Fold b_ih (all gates) + b_hh (r,z gates) into the hoisted input
    # projection; b_hh of the n-gate must stay inside the recurrence (× r).
    b_gi_g = jnp.stack([b_ih_g[0] + b_hh_g[0],
                        b_ih_g[1] + b_hh_g[1],
                        b_ih_g[2]])
    b_gi = jnp.zeros((3, Hp), jnp.float32).at[:, :H].set(b_gi_g)
    b_gi = b_gi.reshape(1, 1, 3 * Hp)
    b_hh_n = jnp.zeros((1, Hp), jnp.float32).at[0, :H].set(b_hh_g[2])

    w_ih_t = w_ih_p.transpose(2, 0, 1).reshape(D, 3 * Hp)                   # (D, 3Hp)
    w_hh_t = w_hh_p.transpose(2, 0, 1).reshape(Hp, 3 * Hp).astype(compute_dtype)

    # ---- hoisted input projection: one large MXU-friendly matmul over T*B
    # rows, produced time-major (no standalone transpose of x). ----
    gi = jnp.einsum("btd,dg->tbg", x_btd, w_ih_t) + b_gi                    # (T, B, 3Hp)
    gi = jnp.pad(gi, ((0, Tp - T), (0, Bp - B), (0, 0)))                    # (Tp, Bp, 3Hp)

    kernel = _make_gru_kernel(TT, Hp, T, mask_tail)

    h_last = pl.pallas_call(
        kernel,
        out_shape=jax.ShapeDtypeStruct((Bp, Hp), jnp.float32),
        grid_spec=pltpu.PrefetchScalarGridSpec(
            num_scalar_prefetch=0,
            grid=(Tp // TT,),
            in_specs=[
                # streamed input-projection blocks, time-major
                pl.BlockSpec((TT, Bp, 3 * Hp), lambda i: (i, 0, 0)),
                # W_hh^T: constant block index -> fetched once, resident in VMEM
                pl.BlockSpec((Hp, 3 * Hp), lambda i: (0, 0)),
                # n-gate hidden bias (tiny, resident)
                pl.BlockSpec((1, Hp), lambda i: (0, 0)),
            ],
            # hidden state: resident output block = recurrence carry
            out_specs=pl.BlockSpec((Bp, Hp), lambda i: (0, 0)),
        ),
        compiler_params=pltpu.CompilerParams(
            dimension_semantics=("arbitrary",)),          # recurrence → sequential
    )(gi, w_hh_t, b_hh_n)

    # FC head on the last hidden state, outside the recurrence kernel.
    h_last = h_last[:B, :H]
    return h_last @ w_fc.T + b_fc


# ---------------- deterministic parameter init (mirrors __init__) -----------

def xavier_uniform(key, shape):
    fan_out, fan_in = shape
    bound = jnp.sqrt(6.0 / (fan_in + fan_out))
    return jax.random.uniform(key, shape, jnp.float32, -bound, bound)


def orthogonal(key, shape):
    rows, cols = shape
    a = jax.random.normal(key, (max(rows, cols), min(rows, cols)), jnp.float32)
    q, r = jnp.linalg.qr(a)
    q = q * jnp.sign(jnp.diagonal(r))[None, :]
    return q if rows >= cols else q.T


def init_params(key, input_dim, hidden_dim, output_dim):
    k1, k2, k3 = jax.random.split(key, 3)
    w_ih = xavier_uniform(k1, (3 * hidden_dim, input_dim))      # weight_ih_l0
    w_hh = orthogonal(k2, (3 * hidden_dim, hidden_dim))         # weight_hh_l0
    b_ih = jnp.zeros((3 * hidden_dim,), jnp.float32)            # bias_ih_l0
    b_hh = jnp.zeros((3 * hidden_dim,), jnp.float32)            # bias_hh_l0
    w_fc = xavier_uniform(k3, (output_dim, hidden_dim))         # fc.weight
    b_fc = jnp.zeros((output_dim,), jnp.float32)                # fc.bias
    return w_ih, w_hh, b_ih, b_hh, w_fc, b_fc


# ---------------- pure-JAX reference (correctness check) --------------------

def gru_ref(x_btd, w_ih, w_hh, b_ih, b_hh, w_fc, b_fc):
    B, T, D = x_btd.shape
    H = w_hh.shape[1]
    h0 = jnp.zeros((B, H), jnp.float32)

    def step(h, x_t):
        gi = x_t @ w_ih.T + b_ih
        gh = h @ w_hh.T + b_hh
        i_r, i_z, i_n = gi[:, :H], gi[:, H:2 * H], gi[:, 2 * H:]
        h_r, h_z, h_n = gh[:, :H], gh[:, H:2 * H], gh[:, 2 * H:]
        r = jax.nn.sigmoid(i_r + h_r)
        z = jax.nn.sigmoid(i_z + h_z)
        n = jnp.tanh(i_n + r * h_n)
        return (1.0 - z) * n + z * h, None

    h_last, _ = jax.lax.scan(step, h0, jnp.transpose(x_btd, (1, 0, 2)))
    return h_last @ w_fc.T + b_fc


if __name__ == "__main__":
    B, T, D, H, O = 2, 8, 4, 32, 4

    key = jax.random.PRNGKey(0)
    kx, kp = jax.random.split(key)
    x = jax.random.normal(kx, (B, T, D), jnp.float32)
    params = init_params(kp, D, H, O)

    ref = gru_ref(x, *params)

    # default path: bf16 hidden matmul (f32 accumulation) — relaxed tolerance
    out = jax.block_until_ready(gru_forward(x, *params))
    assert out.shape == (B, O)
    assert jnp.allclose(out, ref, atol=5e-2, rtol=5e-2), (out, ref)

    # f32 path — tight check against the pure-JAX reference
    out_f32 = jax.block_until_ready(gru_forward(x, *params, use_bf16=False))
    assert jnp.allclose(out_f32, ref, atol=1e-4, rtol=1e-4), (out_f32, ref)

    print("KERNEL_OK")
</pallas_src>

<mosaic_0001>
module attributes {stable_mosaic.version = 11 : i64} {
  func.func @kernel(%arg0: i32, %arg1: memref<8x8x384xf32, #tpu.memory_space<vmem>>, %arg2: memref<128x384xbf16, #tpu.memory_space<vmem>>, %arg3: memref<1x128xf32, #tpu.memory_space<vmem>>, %arg4: memref<8x128xf32, #tpu.memory_space<vmem>>) attributes {dimension_semantics = [#tpu.dimension_semantics<arbitrary>], iteration_bounds = array<i64: 1>, scalar_prefetch = 0 : i64, scratch_operands = 0 : i64, tpu.core_type = #tpu.core_type<tc>, window_params = [{transform_indices = @transform_0, window_bounds = array<i64: 8, 8, 384>}, {pipeline_mode = #tpu.pipeline_mode<synchronous>, transform_indices = @transform_1, window_bounds = array<i64: 128, 384>}, {pipeline_mode = #tpu.pipeline_mode<synchronous>, transform_indices = @transform_2, window_bounds = array<i64: 1, 128>}, {pipeline_mode = #tpu.pipeline_mode<synchronous>, transform_indices = @transform_3, window_bounds = array<i64: 8, 128>}]} {
    %c0_i32 = arith.constant 0 : i32
    %0 = arith.cmpi eq, %arg0, %c0_i32 : i32
    %1 = arith.extui %0 : i1 to i32
    %c0_i32_0 = arith.constant 0 : i32
    %2 = arith.cmpi ne, %1, %c0_i32_0 : i32
    scf.if %2 {
      %cst_56 = arith.constant 0.000000e+00 : f32
      %271 = vector.broadcast %cst_56 : f32 to vector<8x128xf32>
      %c0_57 = arith.constant 0 : index
      %c0_58 = arith.constant 0 : index
      %272 = vector.load %arg4[%c0_57, %c0_58] : memref<8x128xf32, #tpu.memory_space<vmem>>, vector<8x128xf32>
      tpu.vector_store %arg4[%c0_57, %c0_58], %271 {strides = array<i32>} : memref<8x128xf32, #tpu.memory_space<vmem>>, vector<8x128xf32>,
    } else {
    }
    %c0 = arith.constant 0 : index
    %c0_1 = arith.constant 0 : index
    %3 = vector.load %arg2[%c0, %c0_1] : memref<128x384xbf16, #tpu.memory_space<vmem>>, vector<128x384xbf16>
    %c0_2 = arith.constant 0 : index
    %c0_3 = arith.constant 0 : index
    %4 = vector.load %arg3[%c0_2, %c0_3] : memref<1x128xf32, #tpu.memory_space<vmem>>, vector<1x128xf32>
    %c0_4 = arith.constant 0 : index
    %c0_5 = arith.constant 0 : index
    %5 = vector.load %arg4[%c0_4, %c0_5] : memref<8x128xf32, #tpu.memory_space<vmem>>, vector<8x128xf32>
    %c0_i32_6 = arith.constant 0 : i32
    %6 = arith.index_cast %c0_i32_6 : i32 to index
    %c0_7 = arith.constant 0 : index
    %c0_8 = arith.constant 0 : index
    %7 = vector.load %arg1[%6, %c0_7, %c0_8] : memref<8x8x384xf32, #tpu.memory_space<vmem>>, vector<1x8x384xf32>
    %8 = vector.shape_cast %7 : vector<1x8x384xf32> to vector<8x384xf32>
    %9 = arith.truncf %5 : vector<8x128xf32> to vector<8x128xbf16>
    %cst = arith.constant dense<0.000000e+00> : vector<8x384xf32>
    %10 = tpu.matmul %9, %3, %cst {dimension_numbers = #tpu.dot_dimension_numbers<[1], [0], [0], [1], [0, 0, 1, 1], [], []>} : vector<8x128xbf16>, vector<128x384xbf16>, vector<8x384xf32> -> vector<8x384xf32>
    %11 = vector.extract_strided_slice %8 {offsets = [0, 0], sizes = [8, 128], strides = [1, 1]} : vector<8x384xf32> to vector<8x128xf32>
    %12 = vector.extract_strided_slice %10 {offsets = [0, 0], sizes = [8, 128], strides = [1, 1]} : vector<8x384xf32> to vector<8x128xf32>
    %13 = arith.addf %11, %12 : vector<8x128xf32>
    %14 = arith.negf %13 : vector<8x128xf32>
    %15 = math.exp %14 : vector<8x128xf32>
    %cst_9 = arith.constant 1.000000e+00 : f32
    %16 = vector.broadcast %cst_9 : f32 to vector<8x128xf32>
    %17 = arith.addf %16, %15 : vector<8x128xf32>
    %18 = arith.divf %16, %17 : vector<8x128xf32>
    %19 = vector.extract_strided_slice %8 {offsets = [0, 128], sizes = [8, 128], strides = [1, 1]} : vector<8x384xf32> to vector<8x128xf32>
    %20 = vector.extract_strided_slice %10 {offsets = [0, 128], sizes = [8, 128], strides = [1, 1]} : vector<8x384xf32> to vector<8x128xf32>
    %21 = arith.addf %19, %20 : vector<8x128xf32>
    %22 = arith.negf %21 : vector<8x128xf32>
    %23 = math.exp %22 : vector<8x128xf32>
    %cst_10 = arith.constant 1.000000e+00 : f32
    %24 = vector.broadcast %cst_10 : f32 to vector<8x128xf32>
    %25 = arith.addf %24, %23 : vector<8x128xf32>
    %26 = arith.divf %24, %25 : vector<8x128xf32>
    %27 = vector.extract_strided_slice %8 {offsets = [0, 256], sizes = [8, 128], strides = [1, 1]} : vector<8x384xf32> to vector<8x128xf32>
    %28 = vector.extract_strided_slice %10 {offsets = [0, 256], sizes = [8, 128], strides = [1, 1]} : vector<8x384xf32> to vector<8x128xf32>
    %29 = vector.broadcast %4 : vector<1x128xf32> to vector<8x128xf32>
    %30 = arith.addf %28, %29 : vector<8x128xf32>
    %31 = arith.mulf %18, %30 : vector<8x128xf32>
    %32 = arith.addf %27, %31 : vector<8x128xf32>
    %33 = math.tanh %32 : vector<8x128xf32>
    %cst_11 = arith.constant 1.000000e+00 : f32
    %34 = vector.broadcast %cst_11 : f32 to vector<8x128xf32>
    %35 = arith.subf %34, %26 : vector<8x128xf32>
    %36 = arith.mulf %35, %33 : vector<8x128xf32>
    %37 = arith.mulf %26, %5 : vector<8x128xf32>
    %38 = arith.addf %36, %37 : vector<8x128xf32>
    %c1_i32 = arith.constant 1 : i32
    %39 = arith.index_cast %c1_i32 : i32 to index
    %c0_12 = arith.constant 0 : index
    %c0_13 = arith.constant 0 : index
    %40 = vector.load %arg1[%39, %c0_12, %c0_13] : memref<8x8x384xf32, #tpu.memory_space<vmem>>, vector<1x8x384xf32>
    %41 = vector.shape_cast %40 : vector<1x8x384xf32> to vector<8x384xf32>
    %42 = arith.truncf %38 : vector<8x128xf32> to vector<8x128xbf16>
    %cst_14 = arith.constant dense<0.000000e+00> : vector<8x384xf32>
    %43 = tpu.matmul %42, %3, %cst_14 {dimension_numbers = #tpu.dot_dimension_numbers<[1], [0], [0], [1], [0, 0, 1, 1], [], []>} : vector<8x128xbf16>, vector<128x384xbf16>, vector<8x384xf32> -> vector<8x384xf32>
    %44 = vector.extract_strided_slice %41 {offsets = [0, 0], sizes = [8, 128], strides = [1, 1]} : vector<8x384xf32> to vector<8x128xf32>
    %45 = vector.extract_strided_slice %43 {offsets = [0, 0], sizes = [8, 128], strides = [1, 1]} : vector<8x384xf32> to vector<8x128xf32>
    %46 = arith.addf %44, %45 : vector<8x128xf32>
    %47 = arith.negf %46 : vector<8x128xf32>
    %48 = math.exp %47 : vector<8x128xf32>
    %cst_15 = arith.constant 1.000000e+00 : f32
    %49 = vector.broadcast %cst_15 : f32 to vector<8x128xf32>
    %50 = arith.addf %49, %48 : vector<8x128xf32>
    %51 = arith.divf %49, %50 : vector<8x128xf32>
    %52 = vector.extract_strided_slice %41 {offsets = [0, 128], sizes = [8, 128], strides = [1, 1]} : vector<8x384xf32> to vector<8x128xf32>
    %53 = vector.extract_strided_slice %43 {offsets = [0, 128], sizes = [8, 128], strides = [1, 1]} : vector<8x384xf32> to vector<8x128xf32>
    %54 = arith.addf %52, %53 : vector<8x128xf32>
    %55 = arith.negf %54 : vector<8x128xf32>
    %56 = math.exp %55 : vector<8x128xf32>
    %cst_16 = arith.constant 1.000000e+00 : f32
    %57 = vector.broadcast %cst_16 : f32 to vector<8x128xf32>
    %58 = arith.addf %57, %56 : vector<8x128xf32>
    %59 = arith.divf %57, %58 : vector<8x128xf32>
    %60 = vector.extract_strided_slice %41 {offsets = [0, 256], sizes = [8, 128], strides = [1, 1]} : vector<8x384xf32> to vector<8x128xf32>
    %61 = vector.extract_strided_slice %43 {offsets = [0, 256], sizes = [8, 128], strides = [1, 1]} : vector<8x384xf32> to vector<8x128xf32>
    %62 = vector.broadcast %4 : vector<1x128xf32> to vector<8x128xf32>
    %63 = arith.addf %61, %62 : vector<8x128xf32>
    %64 = arith.mulf %51, %63 : vector<8x128xf32>
    %65 = arith.addf %60, %64 : vector<8x128xf32>
    %66 = math.tanh %65 : vector<8x128xf32>
    %cst_17 = arith.constant 1.000000e+00 : f32
    %67 = vector.broadcast %cst_17 : f32 to vector<8x128xf32>
    %68 = arith.subf %67, %59 : vector<8x128xf32>
    %69 = arith.mulf %68, %66 : vector<8x128xf32>
    %70 = arith.mulf %59, %38 : vector<8x128xf32>
    %71 = arith.addf %69, %70 : vector<8x128xf32>
    %c2_i32 = arith.constant 2 : i32
    %72 = arith.index_cast %c2_i32 : i32 to index
    %c0_18 = arith.constant 0 : index
    %c0_19 = arith.constant 0 : index
    %73 = vector.load %arg1[%72, %c0_18, %c0_19] : memref<8x8x384xf32, #tpu.memory_space<vmem>>, vector<1x8x384xf32>
    %74 = vector.shape_cast %73 : vector<1x8x384xf32> to vector<8x384xf32>
    %75 = arith.truncf %71 : vector<8x128xf32> to vector<8x128xbf16>
    %cst_20 = arith.constant dense<0.000000e+00> : vector<8x384xf32>
    %76 = tpu.matmul %75, %3, %cst_20 {dimension_numbers = #tpu.dot_dimension_numbers<[1], [0], [0], [1], [0, 0, 1, 1], [], []>} : vector<8x128xbf16>, vector<128x384xbf16>, vector<8x384xf32> -> vector<8x384xf32>
    %77 = vector.extract_strided_slice %74 {offsets = [0, 0], sizes = [8, 128], strides = [1, 1]} : vector<8x384xf32> to vector<8x128xf32>
    %78 = vector.extract_strided_slice %76 {offsets = [0, 0], sizes = [8, 128], strides = [1, 1]} : vector<8x384xf32> to vector<8x128xf32>
    %79 = arith.addf %77, %78 : vector<8x128xf32>
    %80 = arith.negf %79 : vector<8x128xf32>
    %81 = math.exp %80 : vector<8x128xf32>
    %cst_21 = arith.constant 1.000000e+00 : f32
    %82 = vector.broadcast %cst_21 : f32 to vector<8x128xf32>
    %83 = arith.addf %82, %81 : vector<8x128xf32>
    %84 = arith.divf %82, %83 : vector<8x128xf32>
    %85 = vector.extract_strided_slice %74 {offsets = [0, 128], sizes = [8, 128], strides = [1, 1]} : vector<8x384xf32> to vector<8x128xf32>
    %86 = vector.extract_strided_slice %76 {offsets = [0, 128], sizes = [8, 128], strides = [1, 1]} : vector<8x384xf32> to vector<8x128xf32>
    %87 = arith.addf %85, %86 : vector<8x128xf32>
    %88 = arith.negf %87 : vector<8x128xf32>
    %89 = math.exp %88 : vector<8x128xf32>
    %cst_22 = arith.constant 1.000000e+00 : f32
    %90 = vector.broadcast %cst_22 : f32 to vector<8x128xf32>
    %91 = arith.addf %90, %89 : vector<8x128xf32>
    %92 = arith.divf %90, %91 : vector<8x128xf32>
    %93 = vector.extract_strided_slice %74 {offsets = [0, 256], sizes = [8, 128], strides = [1, 1]} : vector<8x384xf32> to vector<8x128xf32>
    %94 = vector.extract_strided_slice %76 {offsets = [0, 256], sizes = [8, 128], strides = [1, 1]} : vector<8x384xf32> to vector<8x128xf32>
    %95 = vector.broadcast %4 : vector<1x128xf32> to vector<8x128xf32>
    %96 = arith.addf %94, %95 : vector<8x128xf32>
    %97 = arith.mulf %84, %96 : vector<8x128xf32>
    %98 = arith.addf %93, %97 : vector<8x128xf32>
    %99 = math.tanh %98 : vector<8x128xf32>
    %cst_23 = arith.constant 1.000000e+00 : f32
    %100 = vector.broadcast %cst_23 : f32 to vector<8x128xf32>
    %101 = arith.subf %100, %92 : vector<8x128xf32>
    %102 = arith.mulf %101, %99 : vector<8x128xf32>
    %103 = arith.mulf %92, %71 : vector<8x128xf32>
    %104 = arith.addf %102, %103 : vector<8x128xf32>
    %c3_i32 = arith.constant 3 : i32
    %105 = arith.index_cast %c3_i32 : i32 to index
    %c0_24 = arith.constant 0 : index
    %c0_25 = arith.constant 0 : index
    %106 = vector.load %arg1[%105, %c0_24, %c0_25] : memref<8x8x384xf32, #tpu.memory_space<vmem>>, vector<1x8x384xf32>
    %107 = vector.shape_cast %106 : vector<1x8x384xf32> to vector<8x384xf32>
    %108 = arith.truncf %104 : vector<8x128xf32> to vector<8x128xbf16>
    %cst_26 = arith.constant dense<0.000000e+00> : vector<8x384xf32>
    %109 = tpu.matmul %108, %3, %cst_26 {dimension_numbers = #tpu.dot_dimension_numbers<[1], [0], [0], [1], [0, 0, 1, 1], [], []>} : vector<8x128xbf16>, vector<128x384xbf16>, vector<8x384xf32> -> vector<8x384xf32>
    %110 = vector.extract_strided_slice %107 {offsets = [0, 0], sizes = [8, 128], strides = [1, 1]} : vector<8x384xf32> to vector<8x128xf32>
    %111 = vector.extract_strided_slice %109 {offsets = [0, 0], sizes = [8, 128], strides = [1, 1]} : vector<8x384xf32> to vector<8x128xf32>
    %112 = arith.addf %110, %111 : vector<8x128xf32>
    %113 = arith.negf %112 : vector<8x128xf32>
    %114 = math.exp %113 : vector<8x128xf32>
    %cst_27 = arith.constant 1.000000e+00 : f32
    %115 = vector.broadcast %cst_27 : f32 to vector<8x128xf32>
    %116 = arith.addf %115, %114 : vector<8x128xf32>
    %117 = arith.divf %115, %116 : vector<8x128xf32>
    %118 = vector.extract_strided_slice %107 {offsets = [0, 128], sizes = [8, 128], strides = [1, 1]} : vector<8x384xf32> to vector<8x128xf32>
    %119 = vector.extract_strided_slice %109 {offsets = [0, 128], sizes = [8, 128], strides = [1, 1]} : vector<8x384xf32> to vector<8x128xf32>
    %120 = arith.addf %118, %119 : vector<8x128xf32>
    %121 = arith.negf %120 : vector<8x128xf32>
    %122 = math.exp %121 : vector<8x128xf32>
    %cst_28 = arith.constant 1.000000e+00 : f32
    %123 = vector.broadcast %cst_28 : f32 to vector<8x128xf32>
    %124 = arith.addf %123, %122 : vector<8x128xf32>
    %125 = arith.divf %123, %124 : vector<8x128xf32>
    %126 = vector.extract_strided_slice %107 {offsets = [0, 256], sizes = [8, 128], strides = [1, 1]} : vector<8x384xf32> to vector<8x128xf32>
    %127 = vector.extract_strided_slice %109 {offsets = [0, 256], sizes = [8, 128], strides = [1, 1]} : vector<8x384xf32> to vector<8x128xf32>
    %128 = vector.broadcast %4 : vector<1x128xf32> to vector<8x128xf32>
    %129 = arith.addf %127, %128 : vector<8x128xf32>
    %130 = arith.mulf %117, %129 : vector<8x128xf32>
    %131 = arith.addf %126, %130 : vector<8x128xf32>
    %132 = math.tanh %131 : vector<8x128xf32>
    %cst_29 = arith.constant 1.000000e+00 : f32
    %133 = vector.broadcast %cst_29 : f32 to vector<8x128xf32>
    %134 = arith.subf %133, %125 : vector<8x128xf32>
    %135 = arith.mulf %134, %132 : vector<8x128xf32>
    %136 = arith.mulf %125, %104 : vector<8x128xf32>
    %137 = arith.addf %135, %136 : vector<8x128xf32>
    %c4_i32 = arith.constant 4 : i32
    %138 = arith.index_cast %c4_i32 : i32 to index
    %c0_30 = arith.constant 0 : index
    %c0_31 = arith.constant 0 : index
    %139 = vector.load %arg1[%138, %c0_30, %c0_31] : memref<8x8x384xf32, #tpu.memory_space<vmem>>, vector<1x8x384xf32>
    %140 = vector.shape_cast %139 : vector<1x8x384xf32> to vector<8x384xf32>
    %141 = arith.truncf %137 : vector<8x128xf32> to vector<8x128xbf16>
    %cst_32 = arith.constant dense<0.000000e+00> : vector<8x384xf32>
    %142 = tpu.matmul %141, %3, %cst_32 {dimension_numbers = #tpu.dot_dimension_numbers<[1], [0], [0], [1], [0, 0, 1, 1], [], []>} : vector<8x128xbf16>, vector<128x384xbf16>, vector<8x384xf32> -> vector<8x384xf32>
    %143 = vector.extract_strided_slice %140 {offsets = [0, 0], sizes = [8, 128], strides = [1, 1]} : vector<8x384xf32> to vector<8x128xf32>
    %144 = vector.extract_strided_slice %142 {offsets = [0, 0], sizes = [8, 128], strides = [1, 1]} : vector<8x384xf32> to vector<8x128xf32>
    %145 = arith.addf %143, %144 : vector<8x128xf32>
    %146 = arith.negf %145 : vector<8x128xf32>
    %147 = math.exp %146 : vector<8x128xf32>
    %cst_33 = arith.constant 1.000000e+00 : f32
    %148 = vector.broadcast %cst_33 : f32 to vector<8x128xf32>
    %149 = arith.addf %148, %147 : vector<8x128xf32>
    %150 = arith.divf %148, %149 : vector<8x128xf32>
    %151 = vector.extract_strided_slice %140 {offsets = [0, 128], sizes = [8, 128], strides = [1, 1]} : vector<8x384xf32> to vector<8x128xf32>
    %152 = vector.extract_strided_slice %142 {offsets = [0, 128], sizes = [8, 128], strides = [1, 1]} : vector<8x384xf32> to vector<8x128xf32>
    %153 = arith.addf %151, %152 : vector<8x128xf32>
    %154 = arith.negf %153 : vector<8x128xf32>
    %155 = math.exp %154 : vector<8x128xf32>
    %cst_34 = arith.constant 1.000000e+00 : f32
    %156 = vector.broadcast %cst_34 : f32 to vector<8x128xf32>
    %157 = arith.addf %156, %155 : vector<8x128xf32>
    %158 = arith.divf %156, %157 : vector<8x128xf32>
    %159 = vector.extract_strided_slice %140 {offsets = [0, 256], sizes = [8, 128], strides = [1, 1]} : vector<8x384xf32> to vector<8x128xf32>
    %160 = vector.extract_strided_slice %142 {offsets = [0, 256], sizes = [8, 128], strides = [1, 1]} : vector<8x384xf32> to vector<8x128xf32>
    %161 = vector.broadcast %4 : vector<1x128xf32> to vector<8x128xf32>
    %162 = arith.addf %160, %161 : vector<8x128xf32>
    %163 = arith.mulf %150, %162 : vector<8x128xf32>
    %164 = arith.addf %159, %163 : vector<8x128xf32>
    %165 = math.tanh %164 : vector<8x128xf32>
    %cst_35 = arith.constant 1.000000e+00 : f32
    %166 = vector.broadcast %cst_35 : f32 to vector<8x128xf32>
    %167 = arith.subf %166, %158 : vector<8x128xf32>
    %168 = arith.mulf %167, %165 : vector<8x128xf32>
    %169 = arith.mulf %158, %137 : vector<8x128xf32>
    %170 = arith.addf %168, %169 : vector<8x128xf32>
    %c5_i32 = arith.constant 5 : i32
    %171 = arith.index_cast %c5_i32 : i32 to index
    %c0_36 = arith.constant 0 : index
    %c0_37 = arith.constant 0 : index
    %172 = vector.load %arg1[%171, %c0_36, %c0_37] : memref<8x8x384xf32, #tpu.memory_space<vmem>>, vector<1x8x384xf32>
    %173 = vector.shape_cast %172 : vector<1x8x384xf32> to vector<8x384xf32>
    %174 = arith.truncf %170 : vector<8x128xf32> to vector<8x128xbf16>
    %cst_38 = arith.constant dense<0.000000e+00> : vector<8x384xf32>
    %175 = tpu.matmul %174, %3, %cst_38 {dimension_numbers = #tpu.dot_dimension_numbers<[1], [0], [0], [1], [0, 0, 1, 1], [], []>} : vector<8x128xbf16>, vector<128x384xbf16>, vector<8x384xf32> -> vector<8x384xf32>
    %176 = vector.extract_strided_slice %173 {offsets = [0, 0], sizes = [8, 128], strides = [1, 1]} : vector<8x384xf32> to vector<8x128xf32>
    %177 = vector.extract_strided_slice %175 {offsets = [0, 0], sizes = [8, 128], strides = [1, 1]} : vector<8x384xf32> to vector<8x128xf32>
    %178 = arith.addf %176, %177 : vector<8x128xf32>
    %179 = arith.negf %178 : vector<8x128xf32>
    %180 = math.exp %179 : vector<8x128xf32>
    %cst_39 = arith.constant 1.000000e+00 : f32
    %181 = vector.broadcast %cst_39 : f32 to vector<8x128xf32>
    %182 = arith.addf %181, %180 : vector<8x128xf32>
    %183 = arith.divf %181, %182 : vector<8x128xf32>
    %184 = vector.extract_strided_slice %173 {offsets = [0, 128], sizes = [8, 128], strides = [1, 1]} : vector<8x384xf32> to vector<8x128xf32>
    %185 = vector.extract_strided_slice %175 {offsets = [0, 128], sizes = [8, 128], strides = [1, 1]} : vector<8x384xf32> to vector<8x128xf32>
    %186 = arith.addf %184, %185 : vector<8x128xf32>
    %187 = arith.negf %186 : vector<8x128xf32>
    %188 = math.exp %187 : vector<8x128xf32>
    %cst_40 = arith.constant 1.000000e+00 : f32
    %189 = vector.broadcast %cst_40 : f32 to vector<8x128xf32>
    %190 = arith.addf %189, %188 : vector<8x128xf32>
    %191 = arith.divf %189, %190 : vector<8x128xf32>
    %192 = vector.extract_strided_slice %173 {offsets = [0, 256], sizes = [8, 128], strides = [1, 1]} : vector<8x384xf32> to vector<8x128xf32>
    %193 = vector.extract_strided_slice %175 {offsets = [0, 256], sizes = [8, 128], strides = [1, 1]} : vector<8x384xf32> to vector<8x128xf32>
    %194 = vector.broadcast %4 : vector<1x128xf32> to vector<8x128xf32>
    %195 = arith.addf %193, %194 : vector<8x128xf32>
    %196 = arith.mulf %183, %195 : vector<8x128xf32>
    %197 = arith.addf %192, %196 : vector<8x128xf32>
    %198 = math.tanh %197 : vector<8x128xf32>
    %cst_41 = arith.constant 1.000000e+00 : f32
    %199 = vector.broadcast %cst_41 : f32 to vector<8x128xf32>
    %200 = arith.subf %199, %191 : vector<8x128xf32>
    %201 = arith.mulf %200, %198 : vector<8x128xf32>
    %202 = arith.mulf %191, %170 : vector<8x128xf32>
    %203 = arith.addf %201, %202 : vector<8x128xf32>
    %c6_i32 = arith.constant 6 : i32
    %204 = arith.index_cast %c6_i32 : i32 to index
    %c0_42 = arith.constant 0 : index
    %c0_43 = arith.constant 0 : index
    %205 = vector.load %arg1[%204, %c0_42, %c0_43] : memref<8x8x384xf32, #tpu.memory_space<vmem>>, vector<1x8x384xf32>
    %206 = vector.shape_cast %205 : vector<1x8x384xf32> to vector<8x384xf32>
    %207 = arith.truncf %203 : vector<8x128xf32> to vector<8x128xbf16>
    %cst_44 = arith.constant dense<0.000000e+00> : vector<8x384xf32>
    %208 = tpu.matmul %207, %3, %cst_44 {dimension_numbers = #tpu.dot_dimension_numbers<[1], [0], [0], [1], [0, 0, 1, 1], [], []>} : vector<8x128xbf16>, vector<128x384xbf16>, vector<8x384xf32> -> vector<8x384xf32>
    %209 = vector.extract_strided_slice %206 {offsets = [0, 0], sizes = [8, 128], strides = [1, 1]} : vector<8x384xf32> to vector<8x128xf32>
    %210 = vector.extract_strided_slice %208 {offsets = [0, 0], sizes = [8, 128], strides = [1, 1]} : vector<8x384xf32> to vector<8x128xf32>
    %211 = arith.addf %209, %210 : vector<8x128xf32>
    %212 = arith.negf %211 : vector<8x128xf32>
    %213 = math.exp %212 : vector<8x128xf32>
    %cst_45 = arith.constant 1.000000e+00 : f32
    %214 = vector.broadcast %cst_45 : f32 to vector<8x128xf32>
    %215 = arith.addf %214, %213 : vector<8x128xf32>
    %216 = arith.divf %214, %215 : vector<8x128xf32>
    %217 = vector.extract_strided_slice %206 {offsets = [0, 128], sizes = [8, 128], strides = [1, 1]} : vector<8x384xf32> to vector<8x128xf32>
    %218 = vector.extract_strided_slice %208 {offsets = [0, 128], sizes = [8, 128], strides = [1, 1]} : vector<8x384xf32> to vector<8x128xf32>
    %219 = arith.addf %217, %218 : vector<8x128xf32>
    %220 = arith.negf %219 : vector<8x128xf32>
    %221 = math.exp %220 : vector<8x128xf32>
    %cst_46 = arith.constant 1.000000e+00 : f32
    %222 = vector.broadcast %cst_46 : f32 to vector<8x128xf32>
    %223 = arith.addf %222, %221 : vector<8x128xf32>
    %224 = arith.divf %222, %223 : vector<8x128xf32>
    %225 = vector.extract_strided_slice %206 {offsets = [0, 256], sizes = [8, 128], strides = [1, 1]} : vector<8x384xf32> to vector<8x128xf32>
    %226 = vector.extract_strided_slice %208 {offsets = [0, 256], sizes = [8, 128], strides = [1, 1]} : vector<8x384xf32> to vector<8x128xf32>
    %227 = vector.broadcast %4 : vector<1x128xf32> to vector<8x128xf32>
    %228 = arith.addf %226, %227 : vector<8x128xf32>
    %229 = arith.mulf %216, %228 : vector<8x128xf32>
    %230 = arith.addf %225, %229 : vector<8x128xf32>
    %231 = math.tanh %230 : vector<8x128xf32>
    %cst_47 = arith.constant 1.000000e+00 : f32
    %232 = vector.broadcast %cst_47 : f32 to vector<8x128xf32>
    %233 = arith.subf %232, %224 : vector<8x128xf32>
    %234 = arith.mulf %233, %231 : vector<8x128xf32>
    %235 = arith.mulf %224, %203 : vector<8x128xf32>
    %236 = arith.addf %234, %235 : vector<8x128xf32>
    %c7_i32 = arith.constant 7 : i32
    %237 = arith.index_cast %c7_i32 : i32 to index
    %c0_48 = arith.constant 0 : index
    %c0_49 = arith.constant 0 : index
    %238 = vector.load %arg1[%237, %c0_48, %c0_49] : memref<8x8x384xf32, #tpu.memory_space<vmem>>, vector<1x8x384xf32>
    %239 = vector.shape_cast %238 : vector<1x8x384xf32> to vector<8x384xf32>
    %240 = arith.truncf %236 : vector<8x128xf32> to vector<8x128xbf16>
    %cst_50 = arith.constant dense<0.000000e+00> : vector<8x384xf32>
    %241 = tpu.matmul %240, %3, %cst_50 {dimension_numbers = #tpu.dot_dimension_numbers<[1], [0], [0], [1], [0, 0, 1, 1], [], []>} : vector<8x128xbf16>, vector<128x384xbf16>, vector<8x384xf32> -> vector<8x384xf32>
    %242 = vector.extract_strided_slice %239 {offsets = [0, 0], sizes = [8, 128], strides = [1, 1]} : vector<8x384xf32> to vector<8x128xf32>
    %243 = vector.extract_strided_slice %241 {offsets = [0, 0], sizes = [8, 128], strides = [1, 1]} : vector<8x384xf32> to vector<8x128xf32>
    %244 = arith.addf %242, %243 : vector<8x128xf32>
    %245 = arith.negf %244 : vector<8x128xf32>
    %246 = math.exp %245 : vector<8x128xf32>
    %cst_51 = arith.constant 1.000000e+00 : f32
    %247 = vector.broadcast %cst_51 : f32 to vector<8x128xf32>
    %248 = arith.addf %247, %246 : vector<8x128xf32>
    %249 = arith.divf %247, %248 : vector<8x128xf32>
    %250 = vector.extract_strided_slice %239 {offsets = [0, 128], sizes = [8, 128], strides = [1, 1]} : vector<8x384xf32> to vector<8x128xf32>
    %251 = vector.extract_strided_slice %241 {offsets = [0, 128], sizes = [8, 128], strides = [1, 1]} : vector<8x384xf32> to vector<8x128xf32>
    %252 = arith.addf %250, %251 : vector<8x128xf32>
    %253 = arith.negf %252 : vector<8x128xf32>
    %254 = math.exp %253 : vector<8x128xf32>
    %cst_52 = arith.constant 1.000000e+00 : f32
    %255 = vector.broadcast %cst_52 : f32 to vector<8x128xf32>
    %256 = arith.addf %255, %254 : vector<8x128xf32>
    %257 = arith.divf %255, %256 : vector<8x128xf32>
    %258 = vector.extract_strided_slice %239 {offsets = [0, 256], sizes = [8, 128], strides = [1, 1]} : vector<8x384xf32> to vector<8x128xf32>
    %259 = vector.extract_strided_slice %241 {offsets = [0, 256], sizes = [8, 128], strides = [1, 1]} : vector<8x384xf32> to vector<8x128xf32>
    %260 = vector.broadcast %4 : vector<1x128xf32> to vector<8x128xf32>
    %261 = arith.addf %259, %260 : vector<8x128xf32>
    %262 = arith.mulf %249, %261 : vector<8x128xf32>
    %263 = arith.addf %258, %262 : vector<8x128xf32>
    %264 = math.tanh %263 : vector<8x128xf32>
    %cst_53 = arith.constant 1.000000e+00 : f32
    %265 = vector.broadcast %cst_53 : f32 to vector<8x128xf32>
    %266 = arith.subf %265, %257 : vector<8x128xf32>
    %267 = arith.mulf %266, %264 : vector<8x128xf32>
    %268 = arith.mulf %257, %236 : vector<8x128xf32>
    %269 = arith.addf %267, %268 : vector<8x128xf32>
    %c8_i32 = arith.constant 8 : i32
    %c0_54 = arith.constant 0 : index
    %c0_55 = arith.constant 0 : index
    %270 = vector.load %arg4[%c0_54, %c0_55] : memref<8x128xf32, #tpu.memory_space<vmem>>, vector<8x128xf32>
    tpu.vector_store %arg4[%c0_54, %c0_55], %269 {strides = array<i32>} : memref<8x128xf32, #tpu.memory_space<vmem>>, vector<8x128xf32>,
    return
  }
  func.func @transform_0(%arg0: i32) -> (i32, i32, i32) {
    %c0_i32 = arith.constant 0 : i32
    %c0_i32_0 = arith.constant 0 : i32
    %c0_i32_1 = arith.constant 0 : i32
    return %arg0, %c0_i32, %c0_i32_0 : i32, i32, i32
  }
  func.func @transform_1(%arg0: i32) -> (i32, i32) {
    %c0_i32 = arith.constant 0 : i32
    %c0_i32_0 = arith.constant 0 : i32
    %c0_i32_1 = arith.constant 0 : i32
    return %c0_i32, %c0_i32_0 : i32, i32
  }
  func.func @transform_2(%arg0: i32) -> (i32, i32) {
    %c0_i32 = arith.constant 0 : i32
    %c0_i32_0 = arith.constant 0 : i32
    %c0_i32_1 = arith.constant 0 : i32
    return %c0_i32, %c0_i32_0 : i32, i32
  }
  func.func @transform_3(%arg0: i32) -> (i32, i32) {
    %c0_i32 = arith.constant 0 : i32
    %c0_i32_0 = arith.constant 0 : i32
    %c0_i32_1 = arith.constant 0 : i32
    return %c0_i32, %c0_i32_0 : i32, i32
  }
}

</mosaic_0001>

<llo_original>
// kernel: tpu_custom_call.1
$region0: #{tpu_custom_call.1}
  #allocation0 [shape = 'u32[]', space=smem, size = 0x4, offset = 0x4, fixed_abs, tag = 'smem constant byte address 0x4 - core index']
  #allocation1 [shape = 'u32[144,128]{1,0:T(1,128)}', space=vmem, size = 0x12000, scoped, tag = 'internal scratch']
  %s0 = inlined_call_operand.hbm [shape: f32[8,8,384], index: 0, kind: input, shape index: {}]
  %s1 = inlined_call_operand.hbm [shape: bf16[128,384], index: 1, kind: input, shape index: {}]
  %s2 = inlined_call_operand.vmem [shape: f32[1,128], index: 2, kind: input, shape index: {}]
  %s3 = inlined_call_operand.hbm [shape: f32[8,128], index: 3, kind: output, shape index: {}]
  %s4 = sld [smem:[#allocation0]]
  $region34: #{tpu_custom_call.1} parent=0
    _
  %s6 = ssub.s32 1, %s4
  %s7 = scalar_select 0, %s6, %s4
  $region1: #{tpu_custom_call.1} parent=0
    #allocation2 [shape = 'u8[98304]{0}', space=vmem, size = 0x18000, scoped, tag = 'input window, operand 0, single buffered']
    #allocation3 [shape = 's32[1]{0}', space=sflag, size = 0x4, scoped, tag = 'scoped memory for tpu_custom_call.1']
    #allocation4 [shape = 's32[1]{0}', space=sflag, size = 0x4, scoped, tag = 'scoped memory for tpu_custom_call.1']
    #allocation5 [shape = 'u8[98304]{0}', space=vmem, size = 0x18000, scoped, tag = 'input window, operand 1, single buffered']
    #allocation6 [shape = 's32[1]{0}', space=sflag, size = 0x4, scoped, tag = 'scoped memory for tpu_custom_call.1']
    #allocation7 [shape = 'u8[4096]{0}', space=vmem, size = 0x1000, scoped, tag = 'output window, operand 0, single buffered']
    %8 = vsyncpa [#allocation3], 0
    %9 = vsyncpa [#allocation6], 0
    %10 = vsyncpa [#allocation4], 0
    // Predicated region
    $region2: #{tpu_custom_call.1} parent=1 // pred_check
      _
    $region3: #{tpu_custom_call.1} parent=1 // pred_check_branch
      %12 = sbr.rel (0) target = $region5
    $region4: #{tpu_custom_call.1} parent=1 // pred_region
      %s14 = ssub.s32 3072, 3072
      %15 = vsyncadd [#allocation3], %s14
      %s16 = sshll.u32 [#allocation2], 4
      %s17 = int_to_ptr.vmem [resolvable:$true] %s16
      %22 = dma.hbm_to_vmem [thread:$0]  %s0, 3072, %s17, [#allocation3], 384, 384, 24
    $region5: #{tpu_custom_call.1} parent=1 // pred_fallthru
      _
    // Predicated region
    $region6: #{tpu_custom_call.1} parent=1 // pred_check
      _
    $region7: #{tpu_custom_call.1} parent=1 // pred_check_branch
      %24 = sbr.rel (0) target = $region9
    $region8: #{tpu_custom_call.1} parent=1 // pred_region
      %s26 = ssub.s32 3072, 3072
      %27 = vsyncadd [#allocation6], %s26
      %s28 = sshll.u32 [#allocation5], 4
      %s29 = int_to_ptr.vmem [resolvable:$true] %s28
      %34 = dma.hbm_to_vmem [thread:$0]  %s1, 3072, %s29, [#allocation6], 192, 192, 12
    $region9: #{tpu_custom_call.1} parent=1 // pred_fallthru
      _
    // Predicated region
    $region10: #{tpu_custom_call.1} parent=1 // pred_check
      _
    $region11: #{tpu_custom_call.1} parent=1 // pred_check_branch
      %36 = sbr.rel (0) target = $region13
    $region12: #{tpu_custom_call.1} parent=1 // pred_region
      _
    $region13: #{tpu_custom_call.1} parent=1 // pred_fallthru
      _
    // Predicated region
    $region14: #{tpu_custom_call.1} parent=1 // pred_check
      _
    $region15: #{tpu_custom_call.1} parent=1 // pred_check_branch
      %38 = sbr.rel (0) target = $region17
    $region16: #{tpu_custom_call.1} parent=1 // pred_region
      %39 = dma.done [#allocation3], 3072
    $region17: #{tpu_custom_call.1} parent=1 // pred_fallthru
      _
    // Predicated region
    $region18: #{tpu_custom_call.1} parent=1 // pred_check
      _
    $region19: #{tpu_custom_call.1} parent=1 // pred_check_branch
      %41 = sbr.rel (0) target = $region21
    $region20: #{tpu_custom_call.1} parent=1 // pred_region
      %42 = dma.done [#allocation6], 3072
    $region21: #{tpu_custom_call.1} parent=1 // pred_fallthru
      _
    %p44 = scmp.eq.s32.totalorder 0, 0
    // Predicated region
    $region22: #{tpu_custom_call.1} parent=1 // pred_check
      %p45 = pneg %p44
    $region23: #{tpu_custom_call.1} parent=1 // pred_check_branch
      %47 = sbr.rel (%p45) target = $region25
    $region24: #{tpu_custom_call.1} parent=1 // pred_region
      %48 = vst [vmem:[#allocation7] sm:$0xff] 0.0
    $region25: #{tpu_custom_call.1} parent=1 // pred_fallthru
      _
    %v49 = vld [vmem:[#allocation5] sm:$0xff]
    %v50 = vld [vmem:[#allocation5 + $0x8] sm:$0xf]
    %v51 = vld [vmem:[#allocation5 + $0xc] sm:$0xff]
    %v52 = vld [vmem:[#allocation5 + $0x14] sm:$0xf]
    %v53 = vld [vmem:[#allocation5 + $0x18] sm:$0xff]
    %v54 = vld [vmem:[#allocation5 + $0x20] sm:$0xf]
    %v55 = vld [vmem:[#allocation5 + $0x24] sm:$0xff]
    %v56 = vld [vmem:[#allocation5 + $0x2c] sm:$0xf]
    %v57 = vld [vmem:[#allocation5 + $0x30] sm:$0xff]
    %v58 = vld [vmem:[#allocation5 + $0x38] sm:$0xf]
    %v59 = vld [vmem:[#allocation5 + $0x3c] sm:$0xff]
    %v60 = vld [vmem:[#allocation5 + $0x44] sm:$0xf]
    %v61 = vld [vmem:[#allocation5 + $0x48] sm:$0xff]
    %v62 = vld [vmem:[#allocation5 + $0x50] sm:$0xf]
    %v63 = vld [vmem:[#allocation5 + $0x54] sm:$0xff]
    %v64 = vld [vmem:[#allocation5 + $0x5c] sm:$0xf]
    %v65 = vld [vmem:[#allocation5 + $0x60] sm:$0xff]
    %v66 = vld [vmem:[#allocation5 + $0x68] sm:$0xf]
    %v67 = vld [vmem:[#allocation5 + $0x6c] sm:$0xff]
    %v68 = vld [vmem:[#allocation5 + $0x74] sm:$0xf]
    %v69 = vld [vmem:[#allocation5 + $0x78] sm:$0xff]
    %v70 = vld [vmem:[#allocation5 + $0x80] sm:$0xf]
    %v71 = vld [vmem:[#allocation5 + $0x84] sm:$0xff]
    %v72 = vld [vmem:[#allocation5 + $0x8c] sm:$0xf]
    %v73 = vld [vmem:[#allocation5 + $0x90] sm:$0xff]
    %v74 = vld [vmem:[#allocation5 + $0x98] sm:$0xf]
    %v75 = vld [vmem:[#allocation5 + $0x9c] sm:$0xff]
    %v76 = vld [vmem:[#allocation5 + $0xa4] sm:$0xf]
    %v77 = vld [vmem:[#allocation5 + $0xa8] sm:$0xff]
    %v78 = vld [vmem:[#allocation5 + $0xb0] sm:$0xf]
    %v79 = vld [vmem:[#allocation5 + $0xb4] sm:$0xff]
    %v80 = vld [vmem:[#allocation5 + $0xbc] sm:$0xf]
    %v81 = vld [vmem:[%s2] sm:$0x1]
    %v82 = vld [vmem:[#allocation7] sm:$0xff]
    %v83 = vld [vmem:[#allocation2] sm:$0xff]
    %v84 = vld [vmem:[#allocation2 + $0x8] sm:$0xff]
    %v85 = vld [vmem:[#allocation2 + $0x10] sm:$0xff]
    %v86 = vpack.c.bf16 %v82, %v82
    %v119 = vunpack.c.l.b16 %v49
    %v120 = vunpack.c.h.b16 %v49
    %v121 = vunpack.c.l.b16 %v50
    %v122 = vunpack.c.l.b16 %v51
    %v123 = vunpack.c.h.b16 %v51
    %v124 = vunpack.c.l.b16 %v52
    %v125 = vunpack.c.l.b16 %v53
    %v126 = vunpack.c.h.b16 %v53
    %v127 = vunpack.c.l.b16 %v54
    %v128 = vunpack.c.l.b16 %v55
    %v129 = vunpack.c.h.b16 %v55
    %v130 = vunpack.c.l.b16 %v56
    %v131 = vunpack.c.l.b16 %v57
    %v132 = vunpack.c.h.b16 %v57
    %v133 = vunpack.c.l.b16 %v58
    %v134 = vunpack.c.l.b16 %v59
    %v135 = vunpack.c.h.b16 %v59
    %v136 = vunpack.c.l.b16 %v60
    %v137 = vunpack.c.l.b16 %v61
    %v138 = vunpack.c.h.b16 %v61
    %v139 = vunpack.c.l.b16 %v62
    %v140 = vunpack.c.l.b16 %v63
    %v141 = vunpack.c.h.b16 %v63
    %v142 = vunpack.c.l.b16 %v64
    %v143 = vunpack.c.l.b16 %v65
    %v144 = vunpack.c.h.b16 %v65
    %v145 = vunpack.c.l.b16 %v66
    %v146 = vunpack.c.l.b16 %v67
    %v147 = vunpack.c.h.b16 %v67
    %v148 = vunpack.c.l.b16 %v68
    %v149 = vunpack.c.l.b16 %v69
    %v150 = vunpack.c.h.b16 %v69
    %v151 = vunpack.c.l.b16 %v70
    %v152 = vunpack.c.l.b16 %v71
    %v153 = vunpack.c.h.b16 %v71
    %v154 = vunpack.c.l.b16 %v72
    %v155 = vunpack.c.l.b16 %v73
    %v156 = vunpack.c.h.b16 %v73
    %v157 = vunpack.c.l.b16 %v74
    %v158 = vunpack.c.l.b16 %v75
    %v159 = vunpack.c.h.b16 %v75
    %v160 = vunpack.c.l.b16 %v76
    %v161 = vunpack.c.l.b16 %v77
    %v162 = vunpack.c.h.b16 %v77
    %v163 = vunpack.c.l.b16 %v78
    %v164 = vunpack.c.l.b16 %v79
    %v165 = vunpack.c.h.b16 %v79
    %v166 = vunpack.c.l.b16 %v80
    %v167 = vpack.c.b16 %v122, %v119
    %v168 = vpack.c.b16 %v123, %v120
    %v169 = vpack.c.b16 %v124, %v121
    %v170 = vpack.c.b16 %v128, %v125
    %v171 = vpack.c.b16 %v129, %v126
    %v172 = vpack.c.b16 %v130, %v127
    %v173 = vpack.c.b16 %v134, %v131
    %v174 = vpack.c.b16 %v135, %v132
    %v175 = vpack.c.b16 %v136, %v133
    %v176 = vpack.c.b16 %v140, %v137
    %v177 = vpack.c.b16 %v141, %v138
    %v178 = vpack.c.b16 %v142, %v139
    %v179 = vpack.c.b16 %v146, %v143
    %v180 = vpack.c.b16 %v147, %v144
    %v181 = vpack.c.b16 %v148, %v145
    %v182 = vpack.c.b16 %v152, %v149
    %v183 = vpack.c.b16 %v153, %v150
    %v184 = vpack.c.b16 %v154, %v151
    %v185 = vpack.c.b16 %v158, %v155
    %v186 = vpack.c.b16 %v159, %v156
    %v187 = vpack.c.b16 %v160, %v157
    %v188 = vpack.c.b16 %v164, %v161
    %v189 = vpack.c.b16 %v165, %v162
    %v190 = vpack.c.b16 %v166, %v163
    %215 = vmatprep.subr.bf16.mxu0 %v168
    %216 = vmatpush1.bf16.msra.mxu0 %v167
    %217 = vmatprep.subr.bf16.mxu0 %v171
    %218 = vmatpush1.bf16.msra.mxu0 %v170
    %219 = vmatprep.subr.bf16.mxu0 %v174
    %220 = vmatpush1.bf16.msra.mxu0 %v173
    %221 = vmatprep.subr.bf16.mxu0 %v177
    %222 = vmatpush1.bf16.msra.mxu0 %v176
    %223 = vmatprep.subr.bf16.mxu0 %v180
    %224 = vmatpush1.bf16.msra.mxu0 %v179
    %225 = vmatprep.subr.bf16.mxu0 %v183
    %226 = vmatpush1.bf16.msra.mxu0 %v182
    %227 = vmatprep.subr.bf16.mxu0 %v186
    %228 = vmatpush1.bf16.msra.mxu0 %v185
    %229 = vmatprep.subr.bf16.mxu0 %v189
    %230 = vmatpush1.bf16.msra.mxu0 %v188
    %231 = vmatprep.subr.bf16.mxu0 0
    %232 = vmatpush1.bf16.msra.mxu0 0
    %233 = vmatprep.subr.bf16.mxu0 0
    %234 = vmatpush1.bf16.msra.mxu0 0
    %235 = vmatprep.subr.bf16.mxu0 0
    %236 = vmatpush1.bf16.msra.mxu0 0
    %237 = vmatprep.subr.bf16.mxu0 0
    %238 = vmatpush1.bf16.msra.mxu0 0
    %239 = vmatprep.subr.bf16.mxu0 0
    %240 = vmatpush1.bf16.msra.mxu0 0
    %241 = vmatprep.subr.bf16.mxu0 0
    %242 = vmatpush1.bf16.msra.mxu0 0
    %243 = vmatprep.subr.bf16.mxu0 0
    %244 = vmatpush1.bf16.msra.mxu0 0
    %245 = vmatprep.subr.bf16.mxu0 0
    %246 = vmatpush1.bf16.msra.mxu0 0
    %247 = vmatprep.mubr.bf16.mxu0 0
    %248 = vmatmul.mubr.bf16.gmra.mrb[0].mxu0 %v86
    %v249 = vpop.f32.mrb[0].mxu0
    %v250 = vadd.f32 0.0, %v249
    %v251 = vpop.f32.mrb[0].mxu0
    %v252 = vadd.f32 0.0, %v251
    %v253 = vpop.f32.mrb[0].mxu0
    %v254 = vpop.f32.mrb[0].mxu0
    %255 = vdwg.mxu0
    %256 = vmatprep.subr.bf16.mxu0 0
    %257 = vmatpush1.bf16.msra.mxu0 %v169
    %258 = vmatprep.subr.bf16.mxu0 0
    %259 = vmatpush1.bf16.msra.mxu0 %v172
    %260 = vmatprep.subr.bf16.mxu0 0
    %261 = vmatpush1.bf16.msra.mxu0 %v175
    %262 = vmatprep.subr.bf16.mxu0 0
    %263 = vmatpush1.bf16.msra.mxu0 %v178
    %264 = vmatprep.subr.bf16.mxu0 0
    %265 = vmatpush1.bf16.msra.mxu0 %v181
    %266 = vmatprep.subr.bf16.mxu0 0
    %267 = vmatpush1.bf16.msra.mxu0 %v184
    %268 = vmatprep.subr.bf16.mxu0 0
    %269 = vmatpush1.bf16.msra.mxu0 %v187
    %270 = vmatprep.subr.bf16.mxu0 0
    %271 = vmatpush1.bf16.msra.mxu0 %v190
    %272 = vmatprep.subr.bf16.mxu0 0
    %273 = vmatpush1.bf16.msra.mxu0 0
    %274 = vmatprep.subr.bf16.mxu0 0
    %275 = vmatpush1.bf16.msra.mxu0 0
    %276 = vmatprep.subr.bf16.mxu0 0
    %277 = vmatpush1.bf16.msra.mxu0 0
    %278 = vmatprep.subr.bf16.mxu0 0
    %279 = vmatpush1.bf16.msra.mxu0 0
    %280 = vmatprep.subr.bf16.mxu0 0
    %281 = vmatpush1.bf16.msra.mxu0 0
    %282 = vmatprep.subr.bf16.mxu0 0
    %283 = vmatpush1.bf16.msra.mxu0 0
    %284 = vmatprep.subr.bf16.mxu0 0
    %285 = vmatpush1.bf16.msra.mxu0 0
    %286 = vmatprep.subr.bf16.mxu0 0
    %287 = vmatpush1.bf16.msra.mxu0 0
    %288 = vmatprep.mubr.bf16.mxu0 0
    %289 = vmatmul.mubr.bf16.gmra.mrb[0].mxu0 %v86
    %v290 = vpop.f32.mrb[0].mxu0
    %v291 = vadd.f32 0.0, %v290
    %v292 = vpop.f32.mrb[0].mxu0
    %v293 = vpop.f32.mrb[0].mxu0
    %v294 = vpop.f32.mrb[0].mxu0
    %295 = vdwg.mxu0
    %v296 = vadd.f32 %v83, %v250
    %v297 = vxor.u32 %v296, 2147483648
    %v298 = vmul.f32 %v297, 1.442695
    %v299 = vpow.pop %v298
    %v300 = vadd.f32 %v299, 1.0
    %v301 = vrcp.pop %v300
    %v302 = vmul.f32 1.0, %v301
    %v303 = vadd.f32 %v84, %v252
    %v304 = vxor.u32 %v303, 2147483648
    %v305 = vmul.f32 %v304, 1.442695
    %v306 = vpow.pop %v305
    %v307 = vadd.f32 %v306, 1.0
    %v308 = vrcp.pop %v307
    %v309 = vmul.f32 1.0, %v308
    %v311 = vlaneseq
    %v312 = vshrl.u32 %v311, 7
    %v313 = vsub.s32 0, %v312
    %v314 = vrot.slane %v81, %v313
    %v316 = vadd.f32 %v291, %v314
    %v317 = vmul.f32 %v302, %v316
    %v318 = vadd.f32 %v85, %v317
    %v319 = vtanh.pop %v318
    %v320 = vsub.f32 1.0, %v309
    %v321 = vmul.f32 %v320, %v319
    %v322 = vmul.f32 %v309, %v82
    %v323 = vadd.f32 %v321, %v322
    %s324 = scalar_lea.vmem [#allocation2], 24
    %v325 = vld [vmem:[%s324] sm:$0xff]
    %v326 = vld [vmem:[%s324 + $0x8] sm:$0xff]
    %v327 = vld [vmem:[%s324 + $0x10] sm:$0xff]
    %v328 = vpack.c.bf16 %v323, %v323
    %329 = vmatprep.subr.bf16.mxu0 %v168
    %330 = vmatpush1.bf16.msra.mxu0 %v167
    %331 = vmatprep.subr.bf16.mxu0 %v171
    %332 = vmatpush1.bf16.msra.mxu0 %v170
    %333 = vmatprep.subr.bf16.mxu0 %v174
    %334 = vmatpush1.bf16.msra.mxu0 %v173
    %335 = vmatprep.subr.bf16.mxu0 %v177
    %336 = vmatpush1.bf16.msra.mxu0 %v176
    %337 = vmatprep.subr.bf16.mxu0 %v180
    %338 = vmatpush1.bf16.msra.mxu0 %v179
    %339 = vmatprep.subr.bf16.mxu0 %v183
    %340 = vmatpush1.bf16.msra.mxu0 %v182
    %341 = vmatprep.subr.bf16.mxu0 %v186
    %342 = vmatpush1.bf16.msra.mxu0 %v185
    %343 = vmatprep.subr.bf16.mxu0 %v189
    %344 = vmatpush1.bf16.msra.mxu0 %v188
    %345 = vmatprep.subr.bf16.mxu0 0
    %346 = vmatpush1.bf16.msra.mxu0 0
    %347 = vmatprep.subr.bf16.mxu0 0
    %348 = vmatpush1.bf16.msra.mxu0 0
    %349 = vmatprep.subr.bf16.mxu0 0
    %350 = vmatpush1.bf16.msra.mxu0 0
    %351 = vmatprep.subr.bf16.mxu0 0
    %352 = vmatpush1.bf16.msra.mxu0 0
    %353 = vmatprep.subr.bf16.mxu0 0
    %354 = vmatpush1.bf16.msra.mxu0 0
    %355 = vmatprep.subr.bf16.mxu0 0
    %356 = vmatpush1.bf16.msra.mxu0 0
    %357 = vmatprep.subr.bf16.mxu0 0
    %358 = vmatpush1.bf16.msra.mxu0 0
    %359 = vmatprep.subr.bf16.mxu0 0
    %360 = vmatpush1.bf16.msra.mxu0 0
    %361 = vmatprep.mubr.bf16.mxu0 0
    %362 = vmatmul.mubr.bf16.gmra.mrb[0].mxu0 %v328
    %v363 = vpop.f32.mrb[0].mxu0
    %v364 = vadd.f32 0.0, %v363
    %v365 = vpop.f32.mrb[0].mxu0
    %v366 = vadd.f32 0.0, %v365
    %v367 = vpop.f32.mrb[0].mxu0
    %v368 = vpop.f32.mrb[0].mxu0
    %369 = vdwg.mxu0
    %370 = vmatprep.subr.bf16.mxu0 0
    %371 = vmatpush1.bf16.msra.mxu0 %v169
    %372 = vmatprep.subr.bf16.mxu0 0
    %373 = vmatpush1.bf16.msra.mxu0 %v172
    %374 = vmatprep.subr.bf16.mxu0 0
    %375 = vmatpush1.bf16.msra.mxu0 %v175
    %376 = vmatprep.subr.bf16.mxu0 0
    %377 = vmatpush1.bf16.msra.mxu0 %v178
    %378 = vmatprep.subr.bf16.mxu0 0
    %379 = vmatpush1.bf16.msra.mxu0 %v181
    %380 = vmatprep.subr.bf16.mxu0 0
    %381 = vmatpush1.bf16.msra.mxu0 %v184
    %382 = vmatprep.subr.bf16.mxu0 0
    %383 = vmatpush1.bf16.msra.mxu0 %v187
    %384 = vmatprep.subr.bf16.mxu0 0
    %385 = vmatpush1.bf16.msra.mxu0 %v190
    %386 = vmatprep.subr.bf16.mxu0 0
    %387 = vmatpush1.bf16.msra.mxu0 0
    %388 = vmatprep.subr.bf16.mxu0 0
    %389 = vmatpush1.bf16.msra.mxu0 0
    %390 = vmatprep.subr.bf16.mxu0 0
    %391 = vmatpush1.bf16.msra.mxu0 0
    %392 = vmatprep.subr.bf16.mxu0 0
    %393 = vmatpush1.bf16.msra.mxu0 0
    %394 = vmatprep.subr.bf16.mxu0 0
    %395 = vmatpush1.bf16.msra.mxu0 0
    %396 = vmatprep.subr.bf16.mxu0 0
    %397 = vmatpush1.bf16.msra.mxu0 0
    %398 = vmatprep.subr.bf16.mxu0 0
    %399 = vmatpush1.bf16.msra.mxu0 0
    %400 = vmatprep.subr.bf16.mxu0 0
    %401 = vmatpush1.bf16.msra.mxu0 0
    %402 = vmatprep.mubr.bf16.mxu0 0
    %403 = vmatmul.mubr.bf16.gmra.mrb[0].mxu0 %v328
    %v404 = vpop.f32.mrb[0].mxu0
    %v405 = vadd.f32 0.0, %v404
    %v406 = vpop.f32.mrb[0].mxu0
    %v407 = vpop.f32.mrb[0].mxu0
    %v408 = vpop.f32.mrb[0].mxu0
    %409 = vdwg.mxu0
    %v410 = vadd.f32 %v325, %v364
    %v411 = vxor.u32 %v410, 2147483648
    %v412 = vmul.f32 %v411, 1.442695
    %v413 = vpow.pop %v412
    %v414 = vadd.f32 %v413, 1.0
    %v415 = vrcp.pop %v414
    %v416 = vmul.f32 1.0, %v415
    %v417 = vadd.f32 %v326, %v366
    %v418 = vxor.u32 %v417, 2147483648
    %v419 = vmul.f32 %v418, 1.442695
    %v420 = vpow.pop %v419
    %v421 = vadd.f32 %v420, 1.0
    %v422 = vrcp.pop %v421
    %v423 = vmul.f32 1.0, %v422
    %v424 = vadd.f32 %v405, %v314
    %v425 = vmul.f32 %v416, %v424
    %v426 = vadd.f32 %v327, %v425
    %v427 = vtanh.pop %v426
    %v428 = vsub.f32 1.0, %v423
    %v429 = vmul.f32 %v428, %v427
    %v430 = vmul.f32 %v423, %v323
    %v431 = vadd.f32 %v429, %v430
    %s432 = scalar_lea.vmem [#allocation2], 48
    %v433 = vld [vmem:[%s432] sm:$0xff]
    %v434 = vld [vmem:[%s432 + $0x8] sm:$0xff]
    %v435 = vld [vmem:[%s432 + $0x10] sm:$0xff]
    %v436 = vpack.c.bf16 %v431, %v431
    %437 = vmatprep.subr.bf16.mxu0 %v168
    %438 = vmatpush1.bf16.msra.mxu0 %v167
    %439 = vmatprep.subr.bf16.mxu0 %v171
    %440 = vmatpush1.bf16.msra.mxu0 %v170
    %441 = vmatprep.subr.bf16.mxu0 %v174
    %442 = vmatpush1.bf16.msra.mxu0 %v173
    %443 = vmatprep.subr.bf16.mxu0 %v177
    %444 = vmatpush1.bf16.msra.mxu0 %v176
    %445 = vmatprep.subr.bf16.mxu0 %v180
    %446 = vmatpush1.bf16.msra.mxu0 %v179
    %447 = vmatprep.subr.bf16.mxu0 %v183
    %448 = vmatpush1.bf16.msra.mxu0 %v182
    %449 = vmatprep.subr.bf16.mxu0 %v186
    %450 = vmatpush1.bf16.msra.mxu0 %v185
    %451 = vmatprep.subr.bf16.mxu0 %v189
    %452 = vmatpush1.bf16.msra.mxu0 %v188
    %453 = vmatprep.subr.bf16.mxu0 0
    %454 = vmatpush1.bf16.msra.mxu0 0
    %455 = vmatprep.subr.bf16.mxu0 0
    %456 = vmatpush1.bf16.msra.mxu0 0
    %457 = vmatprep.subr.bf16.mxu0 0
    %458 = vmatpush1.bf16.msra.mxu0 0
    %459 = vmatprep.subr.bf16.mxu0 0
    %460 = vmatpush1.bf16.msra.mxu0 0
    %461 = vmatprep.subr.bf16.mxu0 0
    %462 = vmatpush1.bf16.msra.mxu0 0
    %463 = vmatprep.subr.bf16.mxu0 0
    %464 = vmatpush1.bf16.msra.mxu0 0
    %465 = vmatprep.subr.bf16.mxu0 0
    %466 = vmatpush1.bf16.msra.mxu0 0
    %467 = vmatprep.subr.bf16.mxu0 0
    %468 = vmatpush1.bf16.msra.mxu0 0
    %469 = vmatprep.mubr.bf16.mxu0 0
    %470 = vmatmul.mubr.bf16.gmra.mrb[0].mxu0 %v436
    %v471 = vpop.f32.mrb[0].mxu0
    %v472 = vadd.f32 0.0, %v471
    %v473 = vpop.f32.mrb[0].mxu0
    %v474 = vadd.f32 0.0, %v473
    %v475 = vpop.f32.mrb[0].mxu0
    %v476 = vpop.f32.mrb[0].mxu0
    %477 = vdwg.mxu0
    %478 = vmatprep.subr.bf16.mxu0 0
    %479 = vmatpush1.bf16.msra.mxu0 %v169
    %480 = vmatprep.subr.bf16.mxu0 0
    %481 = vmatpush1.bf16.msra.mxu0 %v172
    %482 = vmatprep.subr.bf16.mxu0 0
    %483 = vmatpush1.bf16.msra.mxu0 %v175
    %484 = vmatprep.subr.bf16.mxu0 0
    %485 = vmatpush1.bf16.msra.mxu0 %v178
    %486 = vmatprep.subr.bf16.mxu0 0
    %487 = vmatpush1.bf16.msra.mxu0 %v181
    %488 = vmatprep.subr.bf16.mxu0 0
    %489 = vmatpush1.bf16.msra.mxu0 %v184
    %490 = vmatprep.subr.bf16.mxu0 0
    %491 = vmatpush1.bf16.msra.mxu0 %v187
    %492 = vmatprep.subr.bf16.mxu0 0
    %493 = vmatpush1.bf16.msra.mxu0 %v190
    %494 = vmatprep.subr.bf16.mxu0 0
    %495 = vmatpush1.bf16.msra.mxu0 0
    %496 = vmatprep.subr.bf16.mxu0 0
    %497 = vmatpush1.bf16.msra.mxu0 0
    %498 = vmatprep.subr.bf16.mxu0 0
    %499 = vmatpush1.bf16.msra.mxu0 0
    %500 = vmatprep.subr.bf16.mxu0 0
    %501 = vmatpush1.bf16.msra.mxu0 0
    %502 = vmatprep.subr.bf16.mxu0 0
    %503 = vmatpush1.bf16.msra.mxu0 0
    %504 = vmatprep.subr.bf16.mxu0 0
    %505 = vmatpush1.bf16.msra.mxu0 0
    %506 = vmatprep.subr.bf16.mxu0 0
    %507 = vmatpush1.bf16.msra.mxu0 0
    %508 = vmatprep.subr.bf16.mxu0 0
    %509 = vmatpush1.bf16.msra.mxu0 0
    %510 = vmatprep.mubr.bf16.mxu0 0
    %511 = vmatmul.mubr.bf16.gmra.mrb[0].mxu0 %v436
    %v512 = vpop.f32.mrb[0].mxu0
    %v513 = vadd.f32 0.0, %v512
    %v514 = vpop.f32.mrb[0].mxu0
    %v515 = vpop.f32.mrb[0].mxu0
    %v516 = vpop.f32.mrb[0].mxu0
    %517 = vdwg.mxu0
    %v518 = vadd.f32 %v433, %v472
    %v519 = vxor.u32 %v518, 2147483648
    %v520 = vmul.f32 %v519, 1.442695
    %v521 = vpow.pop %v520
    %v522 = vadd.f32 %v521, 1.0
    %v523 = vrcp.pop %v522
    %v524 = vmul.f32 1.0, %v523
    %v525 = vadd.f32 %v434, %v474
    %v526 = vxor.u32 %v525, 2147483648
    %v527 = vmul.f32 %v526, 1.442695
    %v528 = vpow.pop %v527
    %v529 = vadd.f32 %v528, 1.0
    %v530 = vrcp.pop %v529
    %v531 = vmul.f32 1.0, %v530
    %v532 = vadd.f32 %v513, %v314
    %v533 = vmul.f32 %v524, %v532
    %v534 = vadd.f32 %v435, %v533
    %v535 = vtanh.pop %v534
    %v536 = vsub.f32 1.0, %v531
    %v537 = vmul.f32 %v536, %v535
    %v538 = vmul.f32 %v531, %v431
    %v539 = vadd.f32 %v537, %v538
    %s540 = scalar_lea.vmem [#allocation2], 72
    %v541 = vld [vmem:[%s540] sm:$0xff]
    %v542 = vld [vmem:[%s540 + $0x8] sm:$0xff]
    %v543 = vld [vmem:[%s540 + $0x10] sm:$0xff]
    %v544 = vpack.c.bf16 %v539, %v539
    %545 = vmatprep.subr.bf16.mxu0 %v168
    %546 = vmatpush1.bf16.msra.mxu0 %v167
    %547 = vmatprep.subr.bf16.mxu0 %v171
    %548 = vmatpush1.bf16.msra.mxu0 %v170
    %549 = vmatprep.subr.bf16.mxu0 %v174
    %550 = vmatpush1.bf16.msra.mxu0 %v173
    %551 = vmatprep.subr.bf16.mxu0 %v177
    %552 = vmatpush1.bf16.msra.mxu0 %v176
    %553 = vmatprep.subr.bf16.mxu0 %v180
    %554 = vmatpush1.bf16.msra.mxu0 %v179
    %555 = vmatprep.subr.bf16.mxu0 %v183
    %556 = vmatpush1.bf16.msra.mxu0 %v182
    %557 = vmatprep.subr.bf16.mxu0 %v186
    %558 = vmatpush1.bf16.msra.mxu0 %v185
    %559 = vmatprep.subr.bf16.mxu0 %v189
    %560 = vmatpush1.bf16.msra.mxu0 %v188
    %561 = vmatprep.subr.bf16.mxu0 0
    %562 = vmatpush1.bf16.msra.mxu0 0
    %563 = vmatprep.subr.bf16.mxu0 0
    %564 = vmatpush1.bf16.msra.mxu0 0
    %565 = vmatprep.subr.bf16.mxu0 0
    %566 = vmatpush1.bf16.msra.mxu0 0
    %567 = vmatprep.subr.bf16.mxu0 0
    %568 = vmatpush1.bf16.msra.mxu0 0
    %569 = vmatprep.subr.bf16.mxu0 0
    %570 = vmatpush1.bf16.msra.mxu0 0
    %571 = vmatprep.subr.bf16.mxu0 0
    %572 = vmatpush1.bf16.msra.mxu0 0
    %573 = vmatprep.subr.bf16.mxu0 0
    %574 = vmatpush1.bf16.msra.mxu0 0
    %575 = vmatprep.subr.bf16.mxu0 0
    %576 = vmatpush1.bf16.msra.mxu0 0
    %577 = vmatprep.mubr.bf16.mxu0 0
    %578 = vmatmul.mubr.bf16.gmra.mrb[0].mxu0 %v544
    %v579 = vpop.f32.mrb[0].mxu0
    %v580 = vadd.f32 0.0, %v579
    %v581 = vpop.f32.mrb[0].mxu0
    %v582 = vadd.f32 0.0, %v581
    %v583 = vpop.f32.mrb[0].mxu0
    %v584 = vpop.f32.mrb[0].mxu0
    %585 = vdwg.mxu0
    %586 = vmatprep.subr.bf16.mxu0 0
    %587 = vmatpush1.bf16.msra.mxu0 %v169
    %588 = vmatprep.subr.bf16.mxu0 0
    %589 = vmatpush1.bf16.msra.mxu0 %v172
    %590 = vmatprep.subr.bf16.mxu0 0
    %591 = vmatpush1.bf16.msra.mxu0 %v175
    %592 = vmatprep.subr.bf16.mxu0 0
    %593 = vmatpush1.bf16.msra.mxu0 %v178
    %594 = vmatprep.subr.bf16.mxu0 0
    %595 = vmatpush1.bf16.msra.mxu0 %v181
    %596 = vmatprep.subr.bf16.mxu0 0
    %597 = vmatpush1.bf16.msra.mxu0 %v184
    %598 = vmatprep.subr.bf16.mxu0 0
    %599 = vmatpush1.bf16.msra.mxu0 %v187
    %600 = vmatprep.subr.bf16.mxu0 0
    %601 = vmatpush1.bf16.msra.mxu0 %v190
    %602 = vmatprep.subr.bf16.mxu0 0
    %603 = vmatpush1.bf16.msra.mxu0 0
    %604 = vmatprep.subr.bf16.mxu0 0
    %605 = vmatpush1.bf16.msra.mxu0 0
    %606 = vmatprep.subr.bf16.mxu0 0
    %607 = vmatpush1.bf16.msra.mxu0 0
    %608 = vmatprep.subr.bf16.mxu0 0
    %609 = vmatpush1.bf16.msra.mxu0 0
    %610 = vmatprep.subr.bf16.mxu0 0
    %611 = vmatpush1.bf16.msra.mxu0 0
    %612 = vmatprep.subr.bf16.mxu0 0
    %613 = vmatpush1.bf16.msra.mxu0 0
    %614 = vmatprep.subr.bf16.mxu0 0
    %615 = vmatpush1.bf16.msra.mxu0 0
    %616 = vmatprep.subr.bf16.mxu0 0
    %617 = vmatpush1.bf16.msra.mxu0 0
    %618 = vmatprep.mubr.bf16.mxu0 0
    %619 = vmatmul.mubr.bf16.gmra.mrb[0].mxu0 %v544
    %v620 = vpop.f32.mrb[0].mxu0
    %v621 = vadd.f32 0.0, %v620
    %v622 = vpop.f32.mrb[0].mxu0
    %v623 = vpop.f32.mrb[0].mxu0
    %v624 = vpop.f32.mrb[0].mxu0
    %625 = vdwg.mxu0
    %v626 = vadd.f32 %v541, %v580
    %v627 = vxor.u32 %v626, 2147483648
    %v628 = vmul.f32 %v627, 1.442695
    %v629 = vpow.pop %v628
    %v630 = vadd.f32 %v629, 1.0
    %v631 = vrcp.pop %v630
    %v632 = vmul.f32 1.0, %v631
    %v633 = vadd.f32 %v542, %v582
    %v634 = vxor.u32 %v633, 2147483648
    %v635 = vmul.f32 %v634, 1.442695
    %v636 = vpow.pop %v635
    %v637 = vadd.f32 %v636, 1.0
    %v638 = vrcp.pop %v637
    %v639 = vmul.f32 1.0, %v638
    %v640 = vadd.f32 %v621, %v314
    %v641 = vmul.f32 %v632, %v640
    %v642 = vadd.f32 %v543, %v641
    %v643 = vtanh.pop %v642
    %v644 = vsub.f32 1.0, %v639
    %v645 = vmul.f32 %v644, %v643
    %v646 = vmul.f32 %v639, %v539
    %v647 = vadd.f32 %v645, %v646
    %s648 = scalar_lea.vmem [#allocation2], 96
    %v649 = vld [vmem:[%s648] sm:$0xff]
    %v650 = vld [vmem:[%s648 + $0x8] sm:$0xff]
    %v651 = vld [vmem:[%s648 + $0x10] sm:$0xff]
    %v652 = vpack.c.bf16 %v647, %v647
    %653 = vmatprep.subr.bf16.mxu0 %v168
    %654 = vmatpush1.bf16.msra.mxu0 %v167
    %655 = vmatprep.subr.bf16.mxu0 %v171
    %656 = vmatpush1.bf16.msra.mxu0 %v170
    %657 = vmatprep.subr.bf16.mxu0 %v174
    %658 = vmatpush1.bf16.msra.mxu0 %v173
    %659 = vmatprep.subr.bf16.mxu0 %v177
    %660 = vmatpush1.bf16.msra.mxu0 %v176
    %661 = vmatprep.subr.bf16.mxu0 %v180
    %662 = vmatpush1.bf16.msra.mxu0 %v179
    %663 = vmatprep.subr.bf16.mxu0 %v183
    %664 = vmatpush1.bf16.msra.mxu0 %v182
    %665 = vmatprep.subr.bf16.mxu0 %v186
    %666 = vmatpush1.bf16.msra.mxu0 %v185
    %667 = vmatprep.subr.bf16.mxu0 %v189
    %668 = vmatpush1.bf16.msra.mxu0 %v188
    %669 = vmatprep.subr.bf16.mxu0 0
    %670 = vmatpush1.bf16.msra.mxu0 0
    %671 = vmatprep.subr.bf16.mxu0 0
    %672 = vmatpush1.bf16.msra.mxu0 0
    %673 = vmatprep.subr.bf16.mxu0 0
    %674 = vmatpush1.bf16.msra.mxu0 0
    %675 = vmatprep.subr.bf16.mxu0 0
    %676 = vmatpush1.bf16.msra.mxu0 0
    %677 = vmatprep.subr.bf16.mxu0 0
    %678 = vmatpush1.bf16.msra.mxu0 0
    %679 = vmatprep.subr.bf16.mxu0 0
    %680 = vmatpush1.bf16.msra.mxu0 0
    %681 = vmatprep.subr.bf16.mxu0 0
    %682 = vmatpush1.bf16.msra.mxu0 0
    %683 = vmatprep.subr.bf16.mxu0 0
    %684 = vmatpush1.bf16.msra.mxu0 0
    %685 = vmatprep.mubr.bf16.mxu0 0
    %686 = vmatmul.mubr.bf16.gmra.mrb[0].mxu0 %v652
    %v687 = vpop.f32.mrb[0].mxu0
    %v688 = vadd.f32 0.0, %v687
    %v689 = vpop.f32.mrb[0].mxu0
    %v690 = vadd.f32 0.0, %v689
    %v691 = vpop.f32.mrb[0].mxu0
    %v692 = vpop.f32.mrb[0].mxu0
    %693 = vdwg.mxu0
    %694 = vmatprep.subr.bf16.mxu0 0
    %695 = vmatpush1.bf16.msra.mxu0 %v169
    %696 = vmatprep.subr.bf16.mxu0 0
    %697 = vmatpush1.bf16.msra.mxu0 %v172
    %698 = vmatprep.subr.bf16.mxu0 0
    %699 = vmatpush1.bf16.msra.mxu0 %v175
    %700 = vmatprep.subr.bf16.mxu0 0
    %701 = vmatpush1.bf16.msra.mxu0 %v178
    %702 = vmatprep.subr.bf16.mxu0 0
    %703 = vmatpush1.bf16.msra.mxu0 %v181
    %704 = vmatprep.subr.bf16.mxu0 0
    %705 = vmatpush1.bf16.msra.mxu0 %v184
    %706 = vmatprep.subr.bf16.mxu0 0
    %707 = vmatpush1.bf16.msra.mxu0 %v187
    %708 = vmatprep.subr.bf16.mxu0 0
    %709 = vmatpush1.bf16.msra.mxu0 %v190
    %710 = vmatprep.subr.bf16.mxu0 0
    %711 = vmatpush1.bf16.msra.mxu0 0
    %712 = vmatprep.subr.bf16.mxu0 0
    %713 = vmatpush1.bf16.msra.mxu0 0
    %714 = vmatprep.subr.bf16.mxu0 0
    %715 = vmatpush1.bf16.msra.mxu0 0
    %716 = vmatprep.subr.bf16.mxu0 0
    %717 = vmatpush1.bf16.msra.mxu0 0
    %718 = vmatprep.subr.bf16.mxu0 0
    %719 = vmatpush1.bf16.msra.mxu0 0
    %720 = vmatprep.subr.bf16.mxu0 0
    %721 = vmatpush1.bf16.msra.mxu0 0
    %722 = vmatprep.subr.bf16.mxu0 0
    %723 = vmatpush1.bf16.msra.mxu0 0
    %724 = vmatprep.subr.bf16.mxu0 0
    %725 = vmatpush1.bf16.msra.mxu0 0
    %726 = vmatprep.mubr.bf16.mxu0 0
    %727 = vmatmul.mubr.bf16.gmra.mrb[0].mxu0 %v652
    %v728 = vpop.f32.mrb[0].mxu0
    %v729 = vadd.f32 0.0, %v728
    %v730 = vpop.f32.mrb[0].mxu0
    %v731 = vpop.f32.mrb[0].mxu0
    %v732 = vpop.f32.mrb[0].mxu0
    %733 = vdwg.mxu0
    %v734 = vadd.f32 %v649, %v688
    %v735 = vxor.u32 %v734, 2147483648
    %v736 = vmul.f32 %v735, 1.442695
    %v737 = vpow.pop %v736
    %v738 = vadd.f32 %v737, 1.0
    %v739 = vrcp.pop %v738
    %v740 = vmul.f32 1.0, %v739
    %v741 = vadd.f32 %v650, %v690
    %v742 = vxor.u32 %v741, 2147483648
    %v743 = vmul.f32 %v742, 1.442695
    %v744 = vpow.pop %v743
    %v745 = vadd.f32 %v744, 1.0
    %v746 = vrcp.pop %v745
    %v747 = vmul.f32 1.0, %v746
    %v748 = vadd.f32 %v729, %v314
    %v749 = vmul.f32 %v740, %v748
    %v750 = vadd.f32 %v651, %v749
    %v751 = vtanh.pop %v750
    %v752 = vsub.f32 1.0, %v747
    %v753 = vmul.f32 %v752, %v751
    %v754 = vmul.f32 %v747, %v647
    %v755 = vadd.f32 %v753, %v754
    %s756 = scalar_lea.vmem [#allocation2], 120
    %v757 = vld [vmem:[%s756] sm:$0xff]
    %v758 = vld [vmem:[%s756 + $0x8] sm:$0xff]
    %v759 = vld [vmem:[%s756 + $0x10] sm:$0xff]
    %v760 = vpack.c.bf16 %v755, %v755
    %761 = vmatprep.subr.bf16.mxu0 %v168
    %762 = vmatpush1.bf16.msra.mxu0 %v167
    %763 = vmatprep.subr.bf16.mxu0 %v171
    %764 = vmatpush1.bf16.msra.mxu0 %v170
    %765 = vmatprep.subr.bf16.mxu0 %v174
    %766 = vmatpush1.bf16.msra.mxu0 %v173
    %767 = vmatprep.subr.bf16.mxu0 %v177
    %768 = vmatpush1.bf16.msra.mxu0 %v176
    %769 = vmatprep.subr.bf16.mxu0 %v180
    %770 = vmatpush1.bf16.msra.mxu0 %v179
    %771 = vmatprep.subr.bf16.mxu0 %v183
    %772 = vmatpush1.bf16.msra.mxu0 %v182
    %773 = vmatprep.subr.bf16.mxu0 %v186
    %774 = vmatpush1.bf16.msra.mxu0 %v185
    %775 = vmatprep.subr.bf16.mxu0 %v189
    %776 = vmatpush1.bf16.msra.mxu0 %v188
    %777 = vmatprep.subr.bf16.mxu0 0
    %778 = vmatpush1.bf16.msra.mxu0 0
    %779 = vmatprep.subr.bf16.mxu0 0
    %780 = vmatpush1.bf16.msra.mxu0 0
    %781 = vmatprep.subr.bf16.mxu0 0
    %782 = vmatpush1.bf16.msra.mxu0 0
    %783 = vmatprep.subr.bf16.mxu0 0
    %784 = vmatpush1.bf16.msra.mxu0 0
    %785 = vmatprep.subr.bf16.mxu0 0
    %786 = vmatpush1.bf16.msra.mxu0 0
    %787 = vmatprep.subr.bf16.mxu0 0
    %788 = vmatpush1.bf16.msra.mxu0 0
    %789 = vmatprep.subr.bf16.mxu0 0
    %790 = vmatpush1.bf16.msra.mxu0 0
    %791 = vmatprep.subr.bf16.mxu0 0
    %792 = vmatpush1.bf16.msra.mxu0 0
    %793 = vmatprep.mubr.bf16.mxu0 0
    %794 = vmatmul.mubr.bf16.gmra.mrb[0].mxu0 %v760
    %v795 = vpop.f32.mrb[0].mxu0
    %v796 = vadd.f32 0.0, %v795
    %v797 = vpop.f32.mrb[0].mxu0
    %v798 = vadd.f32 0.0, %v797
    %v799 = vpop.f32.mrb[0].mxu0
    %v800 = vpop.f32.mrb[0].mxu0
    %801 = vdwg.mxu0
    %802 = vmatprep.subr.bf16.mxu0 0
    %803 = vmatpush1.bf16.msra.mxu0 %v169
    %804 = vmatprep.subr.bf16.mxu0 0
    %805 = vmatpush1.bf16.msra.mxu0 %v172
    %806 = vmatprep.subr.bf16.mxu0 0
    %807 = vmatpush1.bf16.msra.mxu0 %v175
    %808 = vmatprep.subr.bf16.mxu0 0
    %809 = vmatpush1.bf16.msra.mxu0 %v178
    %810 = vmatprep.subr.bf16.mxu0 0
    %811 = vmatpush1.bf16.msra.mxu0 %v181
    %812 = vmatprep.subr.bf16.mxu0 0
    %813 = vmatpush1.bf16.msra.mxu0 %v184
    %814 = vmatprep.subr.bf16.mxu0 0
    %815 = vmatpush1.bf16.msra.mxu0 %v187
    %816 = vmatprep.subr.bf16.mxu0 0
    %817 = vmatpush1.bf16.msra.mxu0 %v190
    %818 = vmatprep.subr.bf16.mxu0 0
    %819 = vmatpush1.bf16.msra.mxu0 0
    %820 = vmatprep.subr.bf16.mxu0 0
    %821 = vmatpush1.bf16.msra.mxu0 0
    %822 = vmatprep.subr.bf16.mxu0 0
    %823 = vmatpush1.bf16.msra.mxu0 0
    %824 = vmatprep.subr.bf16.mxu0 0
    %825 = vmatpush1.bf16.msra.mxu0 0
    %826 = vmatprep.subr.bf16.mxu0 0
    %827 = vmatpush1.bf16.msra.mxu0 0
    %828 = vmatprep.subr.bf16.mxu0 0
    %829 = vmatpush1.bf16.msra.mxu0 0
    %830 = vmatprep.subr.bf16.mxu0 0
    %831 = vmatpush1.bf16.msra.mxu0 0
    %832 = vmatprep.subr.bf16.mxu0 0
    %833 = vmatpush1.bf16.msra.mxu0 0
    %834 = vmatprep.mubr.bf16.mxu0 0
    %835 = vmatmul.mubr.bf16.gmra.mrb[0].mxu0 %v760
    %v836 = vpop.f32.mrb[0].mxu0
    %v837 = vadd.f32 0.0, %v836
    %v838 = vpop.f32.mrb[0].mxu0
    %v839 = vpop.f32.mrb[0].mxu0
    %v840 = vpop.f32.mrb[0].mxu0
    %841 = vdwg.mxu0
    %v842 = vadd.f32 %v757, %v796
    %v843 = vxor.u32 %v842, 2147483648
    %v844 = vmul.f32 %v843, 1.442695
    %v845 = vpow.pop %v844
    %v846 = vadd.f32 %v845, 1.0
    %v847 = vrcp.pop %v846
    %v848 = vmul.f32 1.0, %v847
    %v849 = vadd.f32 %v758, %v798
    %v850 = vxor.u32 %v849, 2147483648
    %v851 = vmul.f32 %v850, 1.442695
    %v852 = vpow.pop %v851
    %v853 = vadd.f32 %v852, 1.0
    %v854 = vrcp.pop %v853
    %v855 = vmul.f32 1.0, %v854
    %v856 = vadd.f32 %v837, %v314
    %v857 = vmul.f32 %v848, %v856
    %v858 = vadd.f32 %v759, %v857
    %v859 = vtanh.pop %v858
    %v860 = vsub.f32 1.0, %v855
    %v861 = vmul.f32 %v860, %v859
    %v862 = vmul.f32 %v855, %v755
    %v863 = vadd.f32 %v861, %v862
    %s864 = scalar_lea.vmem [#allocation2], 144
    %v865 = vld [vmem:[%s864] sm:$0xff]
    %v866 = vld [vmem:[%s864 + $0x8] sm:$0xff]
    %v867 = vld [vmem:[%s864 + $0x10] sm:$0xff]
    %v868 = vpack.c.bf16 %v863, %v863
    %869 = vmatprep.subr.bf16.mxu0 %v168
    %870 = vmatpush1.bf16.msra.mxu0 %v167
    %871 = vmatprep.subr.bf16.mxu0 %v171
    %872 = vmatpush1.bf16.msra.mxu0 %v170
    %873 = vmatprep.subr.bf16.mxu0 %v174
    %874 = vmatpush1.bf16.msra.mxu0 %v173
    %875 = vmatprep.subr.bf16.mxu0 %v177
    %876 = vmatpush1.bf16.msra.mxu0 %v176
    %877 = vmatprep.subr.bf16.mxu0 %v180
    %878 = vmatpush1.bf16.msra.mxu0 %v179
    %879 = vmatprep.subr.bf16.mxu0 %v183
    %880 = vmatpush1.bf16.msra.mxu0 %v182
    %881 = vmatprep.subr.bf16.mxu0 %v186
    %882 = vmatpush1.bf16.msra.mxu0 %v185
    %883 = vmatprep.subr.bf16.mxu0 %v189
    %884 = vmatpush1.bf16.msra.mxu0 %v188
    %885 = vmatprep.subr.bf16.mxu0 0
    %886 = vmatpush1.bf16.msra.mxu0 0
    %887 = vmatprep.subr.bf16.mxu0 0
    %888 = vmatpush1.bf16.msra.mxu0 0
    %889 = vmatprep.subr.bf16.mxu0 0
    %890 = vmatpush1.bf16.msra.mxu0 0
    %891 = vmatprep.subr.bf16.mxu0 0
    %892 = vmatpush1.bf16.msra.mxu0 0
    %893 = vmatprep.subr.bf16.mxu0 0
    %894 = vmatpush1.bf16.msra.mxu0 0
    %895 = vmatprep.subr.bf16.mxu0 0
    %896 = vmatpush1.bf16.msra.mxu0 0
    %897 = vmatprep.subr.bf16.mxu0 0
    %898 = vmatpush1.bf16.msra.mxu0 0
    %899 = vmatprep.subr.bf16.mxu0 0
    %900 = vmatpush1.bf16.msra.mxu0 0
    %901 = vmatprep.mubr.bf16.mxu0 0
    %902 = vmatmul.mubr.bf16.gmra.mrb[0].mxu0 %v868
    %v903 = vpop.f32.mrb[0].mxu0
    %v904 = vadd.f32 0.0, %v903
    %v905 = vpop.f32.mrb[0].mxu0
    %v906 = vadd.f32 0.0, %v905
    %v907 = vpop.f32.mrb[0].mxu0
    %v908 = vpop.f32.mrb[0].mxu0
    %909 = vdwg.mxu0
    %910 = vmatprep.subr.bf16.mxu0 0
    %911 = vmatpush1.bf16.msra.mxu0 %v169
    %912 = vmatprep.subr.bf16.mxu0 0
    %913 = vmatpush1.bf16.msra.mxu0 %v172
    %914 = vmatprep.subr.bf16.mxu0 0
    %915 = vmatpush1.bf16.msra.mxu0 %v175
    %916 = vmatprep.subr.bf16.mxu0 0
    %917 = vmatpush1.bf16.msra.mxu0 %v178
    %918 = vmatprep.subr.bf16.mxu0 0
    %919 = vmatpush1.bf16.msra.mxu0 %v181
    %920 = vmatprep.subr.bf16.mxu0 0
    %921 = vmatpush1.bf16.msra.mxu0 %v184
    %922 = vmatprep.subr.bf16.mxu0 0
    %923 = vmatpush1.bf16.msra.mxu0 %v187
    %924 = vmatprep.subr.bf16.mxu0 0
    %925 = vmatpush1.bf16.msra.mxu0 %v190
    %926 = vmatprep.subr.bf16.mxu0 0
    %927 = vmatpush1.bf16.msra.mxu0 0
    %928 = vmatprep.subr.bf16.mxu0 0
    %929 = vmatpush1.bf16.msra.mxu0 0
    %930 = vmatprep.subr.bf16.mxu0 0
    %931 = vmatpush1.bf16.msra.mxu0 0
    %932 = vmatprep.subr.bf16.mxu0 0
    %933 = vmatpush1.bf16.msra.mxu0 0
    %934 = vmatprep.subr.bf16.mxu0 0
    %935 = vmatpush1.bf16.msra.mxu0 0
    %936 = vmatprep.subr.bf16.mxu0 0
    %937 = vmatpush1.bf16.msra.mxu0 0
    %938 = vmatprep.subr.bf16.mxu0 0
    %939 = vmatpush1.bf16.msra.mxu0 0
    %940 = vmatprep.subr.bf16.mxu0 0
    %941 = vmatpush1.bf16.msra.mxu0 0
    %942 = vmatprep.mubr.bf16.mxu0 0
    %943 = vmatmul.mubr.bf16.gmra.mrb[0].mxu0 %v868
    %v944 = vpop.f32.mrb[0].mxu0
    %v945 = vadd.f32 0.0, %v944
    %v946 = vpop.f32.mrb[0].mxu0
    %v947 = vpop.f32.mrb[0].mxu0
    %v948 = vpop.f32.mrb[0].mxu0
    %949 = vdwg.mxu0
    %v950 = vadd.f32 %v865, %v904
    %v951 = vxor.u32 %v950, 2147483648
    %v952 = vmul.f32 %v951, 1.442695
    %v953 = vpow.pop %v952
    %v954 = vadd.f32 %v953, 1.0
    %v955 = vrcp.pop %v954
    %v956 = vmul.f32 1.0, %v955
    %v957 = vadd.f32 %v866, %v906
    %v958 = vxor.u32 %v957, 2147483648
    %v959 = vmul.f32 %v958, 1.442695
    %v960 = vpow.pop %v959
    %v961 = vadd.f32 %v960, 1.0
    %v962 = vrcp.pop %v961
    %v963 = vmul.f32 1.0, %v962
    %v964 = vadd.f32 %v945, %v314
    %v965 = vmul.f32 %v956, %v964
    %v966 = vadd.f32 %v867, %v965
    %v967 = vtanh.pop %v966
    %v968 = vsub.f32 1.0, %v963
    %v969 = vmul.f32 %v968, %v967
    %v970 = vmul.f32 %v963, %v863
    %v971 = vadd.f32 %v969, %v970
    %s972 = scalar_lea.vmem [#allocation2], 168
    %v973 = vld [vmem:[%s972] sm:$0xff]
    %v974 = vld [vmem:[%s972 + $0x8] sm:$0xff]
    %v975 = vld [vmem:[%s972 + $0x10] sm:$0xff]
    %v976 = vpack.c.bf16 %v971, %v971
    %977 = vmatprep.subr.bf16.mxu0 %v168
    %978 = vmatpush1.bf16.msra.mxu0 %v167
    %979 = vmatprep.subr.bf16.mxu0 %v171
    %980 = vmatpush1.bf16.msra.mxu0 %v170
    %981 = vmatprep.subr.bf16.mxu0 %v174
    %982 = vmatpush1.bf16.msra.mxu0 %v173
    %983 = vmatprep.subr.bf16.mxu0 %v177
    %984 = vmatpush1.bf16.msra.mxu0 %v176
    %985 = vmatprep.subr.bf16.mxu0 %v180
    %986 = vmatpush1.bf16.msra.mxu0 %v179
    %987 = vmatprep.subr.bf16.mxu0 %v183
    %988 = vmatpush1.bf16.msra.mxu0 %v182
    %989 = vmatprep.subr.bf16.mxu0 %v186
    %990 = vmatpush1.bf16.msra.mxu0 %v185
    %991 = vmatprep.subr.bf16.mxu0 %v189
    %992 = vmatpush1.bf16.msra.mxu0 %v188
    %993 = vmatprep.subr.bf16.mxu0 0
    %994 = vmatpush1.bf16.msra.mxu0 0
    %995 = vmatprep.subr.bf16.mxu0 0
    %996 = vmatpush1.bf16.msra.mxu0 0
    %997 = vmatprep.subr.bf16.mxu0 0
    %998 = vmatpush1.bf16.msra.mxu0 0
    %999 = vmatprep.subr.bf16.mxu0 0
    %1000 = vmatpush1.bf16.msra.mxu0 0
    %1001 = vmatprep.subr.bf16.mxu0 0
    %1002 = vmatpush1.bf16.msra.mxu0 0
    %1003 = vmatprep.subr.bf16.mxu0 0
    %1004 = vmatpush1.bf16.msra.mxu0 0
    %1005 = vmatprep.subr.bf16.mxu0 0
    %1006 = vmatpush1.bf16.msra.mxu0 0
    %1007 = vmatprep.subr.bf16.mxu0 0
    %1008 = vmatpush1.bf16.msra.mxu0 0
    %1009 = vmatprep.mubr.bf16.mxu0 0
    %1010 = vmatmul.mubr.bf16.gmra.mrb[0].mxu0 %v976
    %v1011 = vpop.f32.mrb[0].mxu0
    %v1012 = vadd.f32 0.0, %v1011
    %v1013 = vpop.f32.mrb[0].mxu0
    %v1014 = vadd.f32 0.0, %v1013
    %v1015 = vpop.f32.mrb[0].mxu0
    %v1016 = vpop.f32.mrb[0].mxu0
    %1017 = vdwg.mxu0
    %1018 = vmatprep.subr.bf16.mxu0 0
    %1019 = vmatpush1.bf16.msra.mxu0 %v169
    %1020 = vmatprep.subr.bf16.mxu0 0
    %1021 = vmatpush1.bf16.msra.mxu0 %v172
    %1022 = vmatprep.subr.bf16.mxu0 0
    %1023 = vmatpush1.bf16.msra.mxu0 %v175
    %1024 = vmatprep.subr.bf16.mxu0 0
    %1025 = vmatpush1.bf16.msra.mxu0 %v178
    %1026 = vmatprep.subr.bf16.mxu0 0
    %1027 = vmatpush1.bf16.msra.mxu0 %v181
    %1028 = vmatprep.subr.bf16.mxu0 0
    %1029 = vmatpush1.bf16.msra.mxu0 %v184
    %1030 = vmatprep.subr.bf16.mxu0 0
    %1031 = vmatpush1.bf16.msra.mxu0 %v187
    %1032 = vmatprep.subr.bf16.mxu0 0
    %1033 = vmatpush1.bf16.msra.mxu0 %v190
    %1034 = vmatprep.subr.bf16.mxu0 0
    %1035 = vmatpush1.bf16.msra.mxu0 0
    %1036 = vmatprep.subr.bf16.mxu0 0
    %1037 = vmatpush1.bf16.msra.mxu0 0
    %1038 = vmatprep.subr.bf16.mxu0 0
    %1039 = vmatpush1.bf16.msra.mxu0 0
    %1040 = vmatprep.subr.bf16.mxu0 0
    %1041 = vmatpush1.bf16.msra.mxu0 0
    %1042 = vmatprep.subr.bf16.mxu0 0
    %1043 = vmatpush1.bf16.msra.mxu0 0
    %1044 = vmatprep.subr.bf16.mxu0 0
    %1045 = vmatpush1.bf16.msra.mxu0 0
    %1046 = vmatprep.subr.bf16.mxu0 0
    %1047 = vmatpush1.bf16.msra.mxu0 0
    %1048 = vmatprep.subr.bf16.mxu0 0
    %1049 = vmatpush1.bf16.msra.mxu0 0
    %1050 = vmatprep.mubr.bf16.mxu0 0
    %1051 = vmatmul.mubr.bf16.gmra.mrb[0].mxu0 %v976
    %v1052 = vpop.f32.mrb[0].mxu0
    %v1053 = vadd.f32 0.0, %v1052
    %v1054 = vpop.f32.mrb[0].mxu0
    %v1055 = vpop.f32.mrb[0].mxu0
    %v1056 = vpop.f32.mrb[0].mxu0
    %1057 = vdwg.mxu0
    %v1058 = vadd.f32 %v973, %v1012
    %v1059 = vxor.u32 %v1058, 2147483648
    %v1060 = vmul.f32 %v1059, 1.442695
    %v1061 = vpow.pop %v1060
    %v1062 = vadd.f32 %v1061, 1.0
    %v1063 = vrcp.pop %v1062
    %v1064 = vmul.f32 1.0, %v1063
    %v1065 = vadd.f32 %v974, %v1014
    %v1066 = vxor.u32 %v1065, 2147483648
    %v1067 = vmul.f32 %v1066, 1.442695
    %v1068 = vpow.pop %v1067
    %v1069 = vadd.f32 %v1068, 1.0
    %v1070 = vrcp.pop %v1069
    %v1071 = vmul.f32 1.0, %v1070
    %v1072 = vadd.f32 %v1053, %v314
    %v1073 = vmul.f32 %v1064, %v1072
    %v1074 = vadd.f32 %v975, %v1073
    %v1075 = vtanh.pop %v1074
    %v1076 = vsub.f32 1.0, %v1071
    %v1077 = vmul.f32 %v1076, %v1075
    %v1078 = vmul.f32 %v1071, %v971
    %v1079 = vadd.f32 %v1077, %v1078
    %1080 = vst [vmem:[#allocation7] sm:$0xff] %v1079
    // Predicated region
    $region26: #{tpu_custom_call.1} parent=1 // pred_check
      _
    $region27: #{tpu_custom_call.1} parent=1 // pred_check_branch
      %1082 = sbr.rel (0) target = $region29
    $region28: #{tpu_custom_call.1} parent=1 // pred_region
      %s1084 = ssub.s32 128, 128
      %1085 = vsyncadd [#allocation4], %s1084
      %s1087 = sshll.u32 [#allocation7], 4
      %s1088 = int_to_ptr.vmem [resolvable:$true] %s1087
      %1090 = dma.vmem_to_hbm [thread:$0]  %s1088, 128, %s3, [#allocation4]
    $region29: #{tpu_custom_call.1} parent=1 // pred_fallthru
      _
    // Predicated region
    $region30: #{tpu_custom_call.1} parent=1 // pred_check
      _
    $region31: #{tpu_custom_call.1} parent=1 // pred_check_branch
      %1092 = sbr.rel (0) target = $region33
    $region32: #{tpu_custom_call.1} parent=1 // pred_region
      %1093 = dma.done [#allocation4], 128
    $region33: #{tpu_custom_call.1} parent=1 // pred_fallthru
      _
    %1094 = vsyncpa [#allocation3], 1
    %1095 = vsyncpa [#allocation6], 1
    %1096 = vsyncpa [#allocation4], 1

</llo_original>
